<compile_context>
chip_gen: v7x
topology: tpu7x:2x2x1
jax: 0.10.0
libtpu: 0.0.40
codegen_flags: <defaults>
</compile_context>

<pallas_src>
import functools

import jax
import jax.numpy as jnp
from jax.experimental import pallas as pl
from jax.experimental.pallas import tpu as pltpu

CHANNELS = 4
KSIZE = 3        # kernel_size
STRIDE = 2       # scale_factor
EPS = 1e-5       # norm_eps


def _downsample_kernel(phases_ref, rmsw_ref, convw_ref, bias_ref, out_ref, *,
                       eps, k, c, hout, wout, use_norm, use_conv):
    """Processes NB batch elements per grid step (vectorized over batch).

    phases_ref : VMEM (NB, 2, 2, C, Hout+1, Wout+1)   stride-2 phase planes
    rmsw_ref   : SMEM (C,)                            RMSNorm weight
    convw_ref  : SMEM (K*K*C*C,)                      weights, flat (kh, kw, ci, co)
    bias_ref   : SMEM (C,)                            bias
    out_ref    : VMEM (NB, C, Hout, Wout)             NCHW output block
    """
    nb = out_ref.shape[0]
    # One (NB, Hout, Wout) accumulator per output channel.
    accs = [jnp.zeros((nb, hout, wout), jnp.float32) for _ in range(c)]

    for ph in range(2):
        khs = [kh for kh in range(k) if kh % 2 == ph]      # taps on this row phase
        for pw in range(2):
            kws = [kw for kw in range(k) if kw % 2 == pw]  # taps on this col phase
            # Load the C channel planes of this (ph, pw) phase exactly once.
            planes = [phases_ref[:, ph, pw, ci].astype(jnp.float32)
                      for ci in range(c)]
            if use_norm:
                # RMSNorm over channels: explicit per-channel sums (VPU adds),
                # rsqrt on the EUP.  Zero (padded) pixels stay zero.
                ssq = planes[0] * planes[0]
                for ci in range(1, c):
                    ssq = ssq + planes[ci] * planes[ci]
                inv = jax.lax.rsqrt(ssq * (1.0 / c) + eps)
                planes = [planes[ci] * inv * rmsw_ref[ci] for ci in range(c)]
            # Conv taps: tap (kh, kw) of output pixel (ho, wo) reads
            # plane[ho + kh//2, wo + kw//2] of phase (kh%2, kw%2).
            for ci in range(c):
                plane = planes[ci]
                for kh in khs:
                    ro = kh // 2
                    for kw in kws:
                        wo = kw // 2
                        tap = plane[:, ro:ro + hout, wo:wo + wout]
                        if use_conv:
                            base = ((kh * k + kw) * c + ci) * c
                            for co in range(c):
                                accs[co] = accs[co] + tap * convw_ref[base + co]
                        else:
                            # AvgPool2d: identity channel mixing, scale at the end.
                            accs[ci] = accs[ci] + tap

    inv_kk = 1.0 / float(k * k)
    for co in range(c):
        if use_conv:
            res = accs[co] + bias_ref[co]
        else:
            res = accs[co] * inv_kk
        out_ref[:, co, :, :] = res.astype(out_ref.dtype)


def downsample2d(x_nchw, rms_w, conv_w, conv_b, *, use_conv, norm_type):
    """Forward pass of Downsample2d.  x_nchw: (N, C, H, W) float32 -> NCHW out."""
    N, C, H, W = x_nchw.shape
    K, S = KSIZE, STRIDE
    assert K == 3 and S == 2, "phase decomposition below assumes kernel=3, stride=2"
    use_norm = norm_type == "rms_norm"
    # TODO(synk): layer_norm variant (mean-subtract + bias) not instantiated here.

    pad_sym = (K - S) // 2                      # Conv2d / AvgPool2d padding (= 0)
    pad_extra = 1 if (K - S) % 2 == 1 else 0    # self._pad -> F.pad(0,1,0,1)
    Hp = H + 2 * pad_sym + pad_extra
    Wp = W + 2 * pad_sym + pad_extra
    Hout = (Hp - K) // S + 1
    Wout = (Wp - K) // S + 1
    HP, WP = Hout + 1, Wout + 1                 # phase-plane extents

    # ---- glue (plain JAX, pure data movement, ~1x input HBM traffic) ----
    # Zero-pad the image to exactly (2*HP, 2*WP); rows/cols beyond PyTorch's own
    # padding are never read by any tap, so the extra zeros are harmless.
    xp = jnp.pad(x_nchw, ((0, 0), (0, 0),
                          (pad_sym, 2 * HP - H - pad_sym),
                          (pad_sym, 2 * WP - W - pad_sym)))
    # phases[n, ph, pw, c, i, j] = xp[n, c, 2*i + ph, 2*j + pw]
    phases = xp.reshape(N, C, HP, 2, WP, 2).transpose(0, 3, 5, 1, 2, 4)

    # Effective per-tap weights, flattened as (kh, kw, ci, co).
    if use_conv:
        w_eff = jnp.transpose(conv_w, (2, 3, 1, 0))           # (K, K, Cin, Cout)
        b_eff = conv_b
    else:
        w_eff = jnp.zeros((K, K, C, C), jnp.float32)          # unused on this path
        b_eff = jnp.zeros((C,), jnp.float32)
    w_flat = w_eff.reshape(-1).astype(jnp.float32)
    b_eff = b_eff.astype(jnp.float32)
    rms_w = rms_w.astype(jnp.float32)

    # Batch-block size: largest small divisor of N whose block fits well inside
    # the (double-buffered) scoped-VMEM budget.
    per_batch_vmem = (4 * C * HP * WP + C * Hout * Wout) * 4   # phases + out, f32
    nb = 1
    for d in range(min(N, 8), 0, -1):
        if N % d == 0 and d * per_batch_vmem <= (2 << 20):
            nb = d
            break
    grid = (N // nb,)

    kern = functools.partial(_downsample_kernel, eps=EPS, k=K, c=C,
                             hout=Hout, wout=Wout, use_norm=use_norm,
                             use_conv=use_conv)

    macs = K * K * C * (C if use_conv else 1)
    flops = N * (Hout * Wout * macs * 2
                 + (4 * HP * WP * (3 * C + 2) if use_norm else 0))
    cost = pl.CostEstimate(
        flops=flops,
        transcendentals=(N * 4 * HP * WP) if use_norm else 0,
        bytes_accessed=int(phases.size) * 4 + N * C * Hout * Wout * 4)

    out = pl.pallas_call(
        kern,
        out_shape=jax.ShapeDtypeStruct((N, C, Hout, Wout), x_nchw.dtype),
        grid=grid,
        in_specs=[
            pl.BlockSpec((nb, 2, 2, C, HP, WP), lambda n: (n, 0, 0, 0, 0, 0)),
            pl.BlockSpec(memory_space=pltpu.MemorySpace.SMEM),   # rms weight
            pl.BlockSpec(memory_space=pltpu.MemorySpace.SMEM),   # conv weights
            pl.BlockSpec(memory_space=pltpu.MemorySpace.SMEM),   # bias
        ],
        out_specs=pl.BlockSpec((nb, C, Hout, Wout), lambda n: (n, 0, 0, 0)),
        compiler_params=pltpu.CompilerParams(
            dimension_semantics=("parallel",)),
        cost_estimate=cost,
    )(phases, rms_w, w_flat, b_eff)

    return out   # already NCHW: (N, C, Hout, Wout)


# ---------------- pure-JAX references (for correctness check) ----------------
def _ref_conv_rms(x, rms_w, conv_w, conv_b):
    xn = jnp.transpose(x, (0, 2, 3, 1))
    var = jnp.mean(xn * xn, axis=-1, keepdims=True)
    xn = xn * jax.lax.rsqrt(var + EPS) * rms_w
    xn = jnp.transpose(xn, (0, 3, 1, 2))
    xp = jnp.pad(xn, ((0, 0), (0, 0), (0, 1), (0, 1)))
    out = jax.lax.conv_general_dilated(
        xp, conv_w, window_strides=(STRIDE, STRIDE), padding="VALID",
        dimension_numbers=("NCHW", "OIHW", "NCHW"))
    return out + conv_b[None, :, None, None]


def _ref_avgpool(x):
    xp = jnp.pad(x, ((0, 0), (0, 0), (0, 1), (0, 1)))
    s = jax.lax.reduce_window(xp, 0.0, jax.lax.add,
                              (1, 1, KSIZE, KSIZE), (1, 1, STRIDE, STRIDE),
                              "VALID")
    return s / float(KSIZE * KSIZE)


if __name__ == "__main__":
    key = jax.random.PRNGKey(0)
    kx, kw, kb, kr = jax.random.split(key, 4)
    x = jax.random.normal(kx, (2, CHANNELS, 16, 16), jnp.float32)
    conv_w = 0.1 * jax.random.normal(kw, (CHANNELS, CHANNELS, KSIZE, KSIZE),
                                     jnp.float32)
    conv_b = 0.1 * jax.random.normal(kb, (CHANNELS,), jnp.float32)
    rms_w = 1.0 + 0.1 * jax.random.normal(kr, (CHANNELS,), jnp.float32)

    # Config 1: use_conv=True, norm_type='rms_norm'
    f_conv = jax.jit(functools.partial(downsample2d, use_conv=True,
                                       norm_type="rms_norm"))
    out1 = jax.block_until_ready(f_conv(x, rms_w, conv_w, conv_b))
    ref1 = _ref_conv_rms(x, rms_w, conv_w, conv_b)
    assert out1.shape == (2, CHANNELS, 8, 8), out1.shape
    assert jnp.allclose(out1, ref1, atol=1e-4, rtol=1e-4), \
        float(jnp.max(jnp.abs(out1 - ref1)))

    # Config 2 (module defaults): use_conv=False, norm_type=None -> AvgPool2d
    f_pool = jax.jit(functools.partial(downsample2d, use_conv=False,
                                       norm_type=None))
    out2 = jax.block_until_ready(f_pool(x, rms_w, conv_w, conv_b))
    ref2 = _ref_avgpool(x)
    assert out2.shape == (2, CHANNELS, 8, 8), out2.shape
    assert jnp.allclose(out2, ref2, atol=1e-4, rtol=1e-4), \
        float(jnp.max(jnp.abs(out2 - ref2)))

    print("KERNEL_OK")
</pallas_src>

<mosaic_0001>
module attributes {stable_mosaic.version = 11 : i64} {
  func.func @_downsample_kernel(%arg0: i32, %arg1: memref<2x2x2x4x9x9xf32, #tpu.memory_space<vmem>>, %arg2: memref<4xf32, #tpu.memory_space<smem>>, %arg3: memref<144xf32, #tpu.memory_space<smem>>, %arg4: memref<4xf32, #tpu.memory_space<smem>>, %arg5: memref<2x4x8x8xf32, #tpu.memory_space<vmem>>) attributes {dimension_semantics = [#tpu.dimension_semantics<parallel>], iteration_bounds = array<i64: 1>, scalar_prefetch = 0 : i64, scratch_operands = 0 : i64, tpu.core_type = #tpu.core_type<tc>, window_params = [{transform_indices = @transform_0, window_bounds = array<i64: 2, 2, 2, 4, 9, 9>}, {transform_indices = @transform_1, window_bounds = array<i64: 4>}, {transform_indices = @transform_2, window_bounds = array<i64: 144>}, {transform_indices = @transform_3, window_bounds = array<i64: 4>}, {transform_indices = @transform_4, window_bounds = array<i64: 2, 4, 8, 8>}]} {
    %cst = arith.constant 0.000000e+00 : f32
    %0 = vector.broadcast %cst : f32 to vector<2x8x8xf32>
    %cst_0 = arith.constant 0.000000e+00 : f32
    %1 = vector.broadcast %cst_0 : f32 to vector<2x8x8xf32>
    %cst_1 = arith.constant 0.000000e+00 : f32
    %2 = vector.broadcast %cst_1 : f32 to vector<2x8x8xf32>
    %cst_2 = arith.constant 0.000000e+00 : f32
    %3 = vector.broadcast %cst_2 : f32 to vector<2x8x8xf32>
    %c0 = arith.constant 0 : index
    %c0_3 = arith.constant 0 : index
    %c0_4 = arith.constant 0 : index
    %c0_5 = arith.constant 0 : index
    %c0_6 = arith.constant 0 : index
    %c0_7 = arith.constant 0 : index
    %4 = vector.load %arg1[%c0, %c0_3, %c0_4, %c0_5, %c0_6, %c0_7] : memref<2x2x2x4x9x9xf32, #tpu.memory_space<vmem>>, vector<2x1x1x1x9x9xf32>
    %5 = vector.shape_cast %4 : vector<2x1x1x1x9x9xf32> to vector<2x9x9xf32>
    %c0_8 = arith.constant 0 : index
    %c0_9 = arith.constant 0 : index
    %c0_10 = arith.constant 0 : index
    %c1 = arith.constant 1 : index
    %c0_11 = arith.constant 0 : index
    %c0_12 = arith.constant 0 : index
    %6 = vector.load %arg1[%c0_8, %c0_9, %c0_10, %c1, %c0_11, %c0_12] : memref<2x2x2x4x9x9xf32, #tpu.memory_space<vmem>>, vector<2x1x1x1x9x9xf32>
    %7 = vector.shape_cast %6 : vector<2x1x1x1x9x9xf32> to vector<2x9x9xf32>
    %c0_13 = arith.constant 0 : index
    %c0_14 = arith.constant 0 : index
    %c0_15 = arith.constant 0 : index
    %c2 = arith.constant 2 : index
    %c0_16 = arith.constant 0 : index
    %c0_17 = arith.constant 0 : index
    %8 = vector.load %arg1[%c0_13, %c0_14, %c0_15, %c2, %c0_16, %c0_17] : memref<2x2x2x4x9x9xf32, #tpu.memory_space<vmem>>, vector<2x1x1x1x9x9xf32>
    %9 = vector.shape_cast %8 : vector<2x1x1x1x9x9xf32> to vector<2x9x9xf32>
    %c0_18 = arith.constant 0 : index
    %c0_19 = arith.constant 0 : index
    %c0_20 = arith.constant 0 : index
    %c3 = arith.constant 3 : index
    %c0_21 = arith.constant 0 : index
    %c0_22 = arith.constant 0 : index
    %10 = vector.load %arg1[%c0_18, %c0_19, %c0_20, %c3, %c0_21, %c0_22] : memref<2x2x2x4x9x9xf32, #tpu.memory_space<vmem>>, vector<2x1x1x1x9x9xf32>
    %11 = vector.shape_cast %10 : vector<2x1x1x1x9x9xf32> to vector<2x9x9xf32>
    %12 = arith.mulf %5, %5 : vector<2x9x9xf32>
    %13 = arith.mulf %7, %7 : vector<2x9x9xf32>
    %14 = arith.addf %12, %13 : vector<2x9x9xf32>
    %15 = arith.mulf %9, %9 : vector<2x9x9xf32>
    %16 = arith.addf %14, %15 : vector<2x9x9xf32>
    %17 = arith.mulf %11, %11 : vector<2x9x9xf32>
    %18 = arith.addf %16, %17 : vector<2x9x9xf32>
    %cst_23 = arith.constant 2.500000e-01 : f32
    %19 = vector.broadcast %cst_23 : f32 to vector<2x9x9xf32>
    %20 = arith.mulf %18, %19 : vector<2x9x9xf32>
    %cst_24 = arith.constant 9.99999974E-6 : f32
    %21 = vector.broadcast %cst_24 : f32 to vector<2x9x9xf32>
    %22 = arith.addf %20, %21 : vector<2x9x9xf32>
    %23 = math.rsqrt %22 : vector<2x9x9xf32>
    %24 = arith.mulf %5, %23 : vector<2x9x9xf32>
    %c0_25 = arith.constant 0 : index
    %25 = memref.load %arg2[%c0_25] : memref<4xf32, #tpu.memory_space<smem>>
    %26 = vector.broadcast %25 : f32 to vector<2x9x9xf32>
    %27 = arith.mulf %24, %26 : vector<2x9x9xf32>
    %28 = arith.mulf %7, %23 : vector<2x9x9xf32>
    %c1_26 = arith.constant 1 : index
    %29 = memref.load %arg2[%c1_26] : memref<4xf32, #tpu.memory_space<smem>>
    %30 = vector.broadcast %29 : f32 to vector<2x9x9xf32>
    %31 = arith.mulf %28, %30 : vector<2x9x9xf32>
    %32 = arith.mulf %9, %23 : vector<2x9x9xf32>
    %c2_27 = arith.constant 2 : index
    %33 = memref.load %arg2[%c2_27] : memref<4xf32, #tpu.memory_space<smem>>
    %34 = vector.broadcast %33 : f32 to vector<2x9x9xf32>
    %35 = arith.mulf %32, %34 : vector<2x9x9xf32>
    %36 = arith.mulf %11, %23 : vector<2x9x9xf32>
    %c3_28 = arith.constant 3 : index
    %37 = memref.load %arg2[%c3_28] : memref<4xf32, #tpu.memory_space<smem>>
    %38 = vector.broadcast %37 : f32 to vector<2x9x9xf32>
    %39 = arith.mulf %36, %38 : vector<2x9x9xf32>
    %40 = vector.extract_strided_slice %27 {offsets = [0, 0, 0], sizes = [2, 8, 8], strides = [1, 1, 1]} : vector<2x9x9xf32> to vector<2x8x8xf32>
    %c0_29 = arith.constant 0 : index
    %41 = memref.load %arg3[%c0_29] : memref<144xf32, #tpu.memory_space<smem>>
    %42 = vector.broadcast %41 : f32 to vector<2x8x8xf32>
    %43 = arith.mulf %40, %42 : vector<2x8x8xf32>
    %44 = arith.addf %0, %43 : vector<2x8x8xf32>
    %c1_30 = arith.constant 1 : index
    %45 = memref.load %arg3[%c1_30] : memref<144xf32, #tpu.memory_space<smem>>
    %46 = vector.broadcast %45 : f32 to vector<2x8x8xf32>
    %47 = arith.mulf %40, %46 : vector<2x8x8xf32>
    %48 = arith.addf %1, %47 : vector<2x8x8xf32>
    %c2_31 = arith.constant 2 : index
    %49 = memref.load %arg3[%c2_31] : memref<144xf32, #tpu.memory_space<smem>>
    %50 = vector.broadcast %49 : f32 to vector<2x8x8xf32>
    %51 = arith.mulf %40, %50 : vector<2x8x8xf32>
    %52 = arith.addf %2, %51 : vector<2x8x8xf32>
    %c3_32 = arith.constant 3 : index
    %53 = memref.load %arg3[%c3_32] : memref<144xf32, #tpu.memory_space<smem>>
    %54 = vector.broadcast %53 : f32 to vector<2x8x8xf32>
    %55 = arith.mulf %40, %54 : vector<2x8x8xf32>
    %56 = arith.addf %3, %55 : vector<2x8x8xf32>
    %57 = vector.extract_strided_slice %27 {offsets = [0, 0, 1], sizes = [2, 8, 8], strides = [1, 1, 1]} : vector<2x9x9xf32> to vector<2x8x8xf32>
    %c32 = arith.constant 32 : index
    %58 = memref.load %arg3[%c32] : memref<144xf32, #tpu.memory_space<smem>>
    %59 = vector.broadcast %58 : f32 to vector<2x8x8xf32>
    %60 = arith.mulf %57, %59 : vector<2x8x8xf32>
    %61 = arith.addf %44, %60 : vector<2x8x8xf32>
    %c33 = arith.constant 33 : index
    %62 = memref.load %arg3[%c33] : memref<144xf32, #tpu.memory_space<smem>>
    %63 = vector.broadcast %62 : f32 to vector<2x8x8xf32>
    %64 = arith.mulf %57, %63 : vector<2x8x8xf32>
    %65 = arith.addf %48, %64 : vector<2x8x8xf32>
    %c34 = arith.constant 34 : index
    %66 = memref.load %arg3[%c34] : memref<144xf32, #tpu.memory_space<smem>>
    %67 = vector.broadcast %66 : f32 to vector<2x8x8xf32>
    %68 = arith.mulf %57, %67 : vector<2x8x8xf32>
    %69 = arith.addf %52, %68 : vector<2x8x8xf32>
    %c35 = arith.constant 35 : index
    %70 = memref.load %arg3[%c35] : memref<144xf32, #tpu.memory_space<smem>>
    %71 = vector.broadcast %70 : f32 to vector<2x8x8xf32>
    %72 = arith.mulf %57, %71 : vector<2x8x8xf32>
    %73 = arith.addf %56, %72 : vector<2x8x8xf32>
    %74 = vector.extract_strided_slice %27 {offsets = [0, 1, 0], sizes = [2, 8, 8], strides = [1, 1, 1]} : vector<2x9x9xf32> to vector<2x8x8xf32>
    %c96 = arith.constant 96 : index
    %75 = memref.load %arg3[%c96] : memref<144xf32, #tpu.memory_space<smem>>
    %76 = vector.broadcast %75 : f32 to vector<2x8x8xf32>
    %77 = arith.mulf %74, %76 : vector<2x8x8xf32>
    %78 = arith.addf %61, %77 : vector<2x8x8xf32>
    %c97 = arith.constant 97 : index
    %79 = memref.load %arg3[%c97] : memref<144xf32, #tpu.memory_space<smem>>
    %80 = vector.broadcast %79 : f32 to vector<2x8x8xf32>
    %81 = arith.mulf %74, %80 : vector<2x8x8xf32>
    %82 = arith.addf %65, %81 : vector<2x8x8xf32>
    %c98 = arith.constant 98 : index
    %83 = memref.load %arg3[%c98] : memref<144xf32, #tpu.memory_space<smem>>
    %84 = vector.broadcast %83 : f32 to vector<2x8x8xf32>
    %85 = arith.mulf %74, %84 : vector<2x8x8xf32>
    %86 = arith.addf %69, %85 : vector<2x8x8xf32>
    %c99 = arith.constant 99 : index
    %87 = memref.load %arg3[%c99] : memref<144xf32, #tpu.memory_space<smem>>
    %88 = vector.broadcast %87 : f32 to vector<2x8x8xf32>
    %89 = arith.mulf %74, %88 : vector<2x8x8xf32>
    %90 = arith.addf %73, %89 : vector<2x8x8xf32>
    %91 = vector.extract_strided_slice %27 {offsets = [0, 1, 1], sizes = [2, 8, 8], strides = [1, 1, 1]} : vector<2x9x9xf32> to vector<2x8x8xf32>
    %c128 = arith.constant 128 : index
    %92 = memref.load %arg3[%c128] : memref<144xf32, #tpu.memory_space<smem>>
    %93 = vector.broadcast %92 : f32 to vector<2x8x8xf32>
    %94 = arith.mulf %91, %93 : vector<2x8x8xf32>
    %95 = arith.addf %78, %94 : vector<2x8x8xf32>
    %c129 = arith.constant 129 : index
    %96 = memref.load %arg3[%c129] : memref<144xf32, #tpu.memory_space<smem>>
    %97 = vector.broadcast %96 : f32 to vector<2x8x8xf32>
    %98 = arith.mulf %91, %97 : vector<2x8x8xf32>
    %99 = arith.addf %82, %98 : vector<2x8x8xf32>
    %c130 = arith.constant 130 : index
    %100 = memref.load %arg3[%c130] : memref<144xf32, #tpu.memory_space<smem>>
    %101 = vector.broadcast %100 : f32 to vector<2x8x8xf32>
    %102 = arith.mulf %91, %101 : vector<2x8x8xf32>
    %103 = arith.addf %86, %102 : vector<2x8x8xf32>
    %c131 = arith.constant 131 : index
    %104 = memref.load %arg3[%c131] : memref<144xf32, #tpu.memory_space<smem>>
    %105 = vector.broadcast %104 : f32 to vector<2x8x8xf32>
    %106 = arith.mulf %91, %105 : vector<2x8x8xf32>
    %107 = arith.addf %90, %106 : vector<2x8x8xf32>
    %108 = vector.extract_strided_slice %31 {offsets = [0, 0, 0], sizes = [2, 8, 8], strides = [1, 1, 1]} : vector<2x9x9xf32> to vector<2x8x8xf32>
    %c4 = arith.constant 4 : index
    %109 = memref.load %arg3[%c4] : memref<144xf32, #tpu.memory_space<smem>>
    %110 = vector.broadcast %109 : f32 to vector<2x8x8xf32>
    %111 = arith.mulf %108, %110 : vector<2x8x8xf32>
    %112 = arith.addf %95, %111 : vector<2x8x8xf32>
    %c5 = arith.constant 5 : index
    %113 = memref.load %arg3[%c5] : memref<144xf32, #tpu.memory_space<smem>>
    %114 = vector.broadcast %113 : f32 to vector<2x8x8xf32>
    %115 = arith.mulf %108, %114 : vector<2x8x8xf32>
    %116 = arith.addf %99, %115 : vector<2x8x8xf32>
    %c6 = arith.constant 6 : index
    %117 = memref.load %arg3[%c6] : memref<144xf32, #tpu.memory_space<smem>>
    %118 = vector.broadcast %117 : f32 to vector<2x8x8xf32>
    %119 = arith.mulf %108, %118 : vector<2x8x8xf32>
    %120 = arith.addf %103, %119 : vector<2x8x8xf32>
    %c7 = arith.constant 7 : index
    %121 = memref.load %arg3[%c7] : memref<144xf32, #tpu.memory_space<smem>>
    %122 = vector.broadcast %121 : f32 to vector<2x8x8xf32>
    %123 = arith.mulf %108, %122 : vector<2x8x8xf32>
    %124 = arith.addf %107, %123 : vector<2x8x8xf32>
    %125 = vector.extract_strided_slice %31 {offsets = [0, 0, 1], sizes = [2, 8, 8], strides = [1, 1, 1]} : vector<2x9x9xf32> to vector<2x8x8xf32>
    %c36 = arith.constant 36 : index
    %126 = memref.load %arg3[%c36] : memref<144xf32, #tpu.memory_space<smem>>
    %127 = vector.broadcast %126 : f32 to vector<2x8x8xf32>
    %128 = arith.mulf %125, %127 : vector<2x8x8xf32>
    %129 = arith.addf %112, %128 : vector<2x8x8xf32>
    %c37 = arith.constant 37 : index
    %130 = memref.load %arg3[%c37] : memref<144xf32, #tpu.memory_space<smem>>
    %131 = vector.broadcast %130 : f32 to vector<2x8x8xf32>
    %132 = arith.mulf %125, %131 : vector<2x8x8xf32>
    %133 = arith.addf %116, %132 : vector<2x8x8xf32>
    %c38 = arith.constant 38 : index
    %134 = memref.load %arg3[%c38] : memref<144xf32, #tpu.memory_space<smem>>
    %135 = vector.broadcast %134 : f32 to vector<2x8x8xf32>
    %136 = arith.mulf %125, %135 : vector<2x8x8xf32>
    %137 = arith.addf %120, %136 : vector<2x8x8xf32>
    %c39 = arith.constant 39 : index
    %138 = memref.load %arg3[%c39] : memref<144xf32, #tpu.memory_space<smem>>
    %139 = vector.broadcast %138 : f32 to vector<2x8x8xf32>
    %140 = arith.mulf %125, %139 : vector<2x8x8xf32>
    %141 = arith.addf %124, %140 : vector<2x8x8xf32>
    %142 = vector.extract_strided_slice %31 {offsets = [0, 1, 0], sizes = [2, 8, 8], strides = [1, 1, 1]} : vector<2x9x9xf32> to vector<2x8x8xf32>
    %c100 = arith.constant 100 : index
    %143 = memref.load %arg3[%c100] : memref<144xf32, #tpu.memory_space<smem>>
    %144 = vector.broadcast %143 : f32 to vector<2x8x8xf32>
    %145 = arith.mulf %142, %144 : vector<2x8x8xf32>
    %146 = arith.addf %129, %145 : vector<2x8x8xf32>
    %c101 = arith.constant 101 : index
    %147 = memref.load %arg3[%c101] : memref<144xf32, #tpu.memory_space<smem>>
    %148 = vector.broadcast %147 : f32 to vector<2x8x8xf32>
    %149 = arith.mulf %142, %148 : vector<2x8x8xf32>
    %150 = arith.addf %133, %149 : vector<2x8x8xf32>
    %c102 = arith.constant 102 : index
    %151 = memref.load %arg3[%c102] : memref<144xf32, #tpu.memory_space<smem>>
    %152 = vector.broadcast %151 : f32 to vector<2x8x8xf32>
    %153 = arith.mulf %142, %152 : vector<2x8x8xf32>
    %154 = arith.addf %137, %153 : vector<2x8x8xf32>
    %c103 = arith.constant 103 : index
    %155 = memref.load %arg3[%c103] : memref<144xf32, #tpu.memory_space<smem>>
    %156 = vector.broadcast %155 : f32 to vector<2x8x8xf32>
    %157 = arith.mulf %142, %156 : vector<2x8x8xf32>
    %158 = arith.addf %141, %157 : vector<2x8x8xf32>
    %159 = vector.extract_strided_slice %31 {offsets = [0, 1, 1], sizes = [2, 8, 8], strides = [1, 1, 1]} : vector<2x9x9xf32> to vector<2x8x8xf32>
    %c132 = arith.constant 132 : index
    %160 = memref.load %arg3[%c132] : memref<144xf32, #tpu.memory_space<smem>>
    %161 = vector.broadcast %160 : f32 to vector<2x8x8xf32>
    %162 = arith.mulf %159, %161 : vector<2x8x8xf32>
    %163 = arith.addf %146, %162 : vector<2x8x8xf32>
    %c133 = arith.constant 133 : index
    %164 = memref.load %arg3[%c133] : memref<144xf32, #tpu.memory_space<smem>>
    %165 = vector.broadcast %164 : f32 to vector<2x8x8xf32>
    %166 = arith.mulf %159, %165 : vector<2x8x8xf32>
    %167 = arith.addf %150, %166 : vector<2x8x8xf32>
    %c134 = arith.constant 134 : index
    %168 = memref.load %arg3[%c134] : memref<144xf32, #tpu.memory_space<smem>>
    %169 = vector.broadcast %168 : f32 to vector<2x8x8xf32>
    %170 = arith.mulf %159, %169 : vector<2x8x8xf32>
    %171 = arith.addf %154, %170 : vector<2x8x8xf32>
    %c135 = arith.constant 135 : index
    %172 = memref.load %arg3[%c135] : memref<144xf32, #tpu.memory_space<smem>>
    %173 = vector.broadcast %172 : f32 to vector<2x8x8xf32>
    %174 = arith.mulf %159, %173 : vector<2x8x8xf32>
    %175 = arith.addf %158, %174 : vector<2x8x8xf32>
    %176 = vector.extract_strided_slice %35 {offsets = [0, 0, 0], sizes = [2, 8, 8], strides = [1, 1, 1]} : vector<2x9x9xf32> to vector<2x8x8xf32>
    %c8 = arith.constant 8 : index
    %177 = memref.load %arg3[%c8] : memref<144xf32, #tpu.memory_space<smem>>
    %178 = vector.broadcast %177 : f32 to vector<2x8x8xf32>
    %179 = arith.mulf %176, %178 : vector<2x8x8xf32>
    %180 = arith.addf %163, %179 : vector<2x8x8xf32>
    %c9 = arith.constant 9 : index
    %181 = memref.load %arg3[%c9] : memref<144xf32, #tpu.memory_space<smem>>
    %182 = vector.broadcast %181 : f32 to vector<2x8x8xf32>
    %183 = arith.mulf %176, %182 : vector<2x8x8xf32>
    %184 = arith.addf %167, %183 : vector<2x8x8xf32>
    %c10 = arith.constant 10 : index
    %185 = memref.load %arg3[%c10] : memref<144xf32, #tpu.memory_space<smem>>
    %186 = vector.broadcast %185 : f32 to vector<2x8x8xf32>
    %187 = arith.mulf %176, %186 : vector<2x8x8xf32>
    %188 = arith.addf %171, %187 : vector<2x8x8xf32>
    %c11 = arith.constant 11 : index
    %189 = memref.load %arg3[%c11] : memref<144xf32, #tpu.memory_space<smem>>
    %190 = vector.broadcast %189 : f32 to vector<2x8x8xf32>
    %191 = arith.mulf %176, %190 : vector<2x8x8xf32>
    %192 = arith.addf %175, %191 : vector<2x8x8xf32>
    %193 = vector.extract_strided_slice %35 {offsets = [0, 0, 1], sizes = [2, 8, 8], strides = [1, 1, 1]} : vector<2x9x9xf32> to vector<2x8x8xf32>
    %c40 = arith.constant 40 : index
    %194 = memref.load %arg3[%c40] : memref<144xf32, #tpu.memory_space<smem>>
    %195 = vector.broadcast %194 : f32 to vector<2x8x8xf32>
    %196 = arith.mulf %193, %195 : vector<2x8x8xf32>
    %197 = arith.addf %180, %196 : vector<2x8x8xf32>
    %c41 = arith.constant 41 : index
    %198 = memref.load %arg3[%c41] : memref<144xf32, #tpu.memory_space<smem>>
    %199 = vector.broadcast %198 : f32 to vector<2x8x8xf32>
    %200 = arith.mulf %193, %199 : vector<2x8x8xf32>
    %201 = arith.addf %184, %200 : vector<2x8x8xf32>
    %c42 = arith.constant 42 : index
    %202 = memref.load %arg3[%c42] : memref<144xf32, #tpu.memory_space<smem>>
    %203 = vector.broadcast %202 : f32 to vector<2x8x8xf32>
    %204 = arith.mulf %193, %203 : vector<2x8x8xf32>
    %205 = arith.addf %188, %204 : vector<2x8x8xf32>
    %c43 = arith.constant 43 : index
    %206 = memref.load %arg3[%c43] : memref<144xf32, #tpu.memory_space<smem>>
    %207 = vector.broadcast %206 : f32 to vector<2x8x8xf32>
    %208 = arith.mulf %193, %207 : vector<2x8x8xf32>
    %209 = arith.addf %192, %208 : vector<2x8x8xf32>
    %210 = vector.extract_strided_slice %35 {offsets = [0, 1, 0], sizes = [2, 8, 8], strides = [1, 1, 1]} : vector<2x9x9xf32> to vector<2x8x8xf32>
    %c104 = arith.constant 104 : index
    %211 = memref.load %arg3[%c104] : memref<144xf32, #tpu.memory_space<smem>>
    %212 = vector.broadcast %211 : f32 to vector<2x8x8xf32>
    %213 = arith.mulf %210, %212 : vector<2x8x8xf32>
    %214 = arith.addf %197, %213 : vector<2x8x8xf32>
    %c105 = arith.constant 105 : index
    %215 = memref.load %arg3[%c105] : memref<144xf32, #tpu.memory_space<smem>>
    %216 = vector.broadcast %215 : f32 to vector<2x8x8xf32>
    %217 = arith.mulf %210, %216 : vector<2x8x8xf32>
    %218 = arith.addf %201, %217 : vector<2x8x8xf32>
    %c106 = arith.constant 106 : index
    %219 = memref.load %arg3[%c106] : memref<144xf32, #tpu.memory_space<smem>>
    %220 = vector.broadcast %219 : f32 to vector<2x8x8xf32>
    %221 = arith.mulf %210, %220 : vector<2x8x8xf32>
    %222 = arith.addf %205, %221 : vector<2x8x8xf32>
    %c107 = arith.constant 107 : index
    %223 = memref.load %arg3[%c107] : memref<144xf32, #tpu.memory_space<smem>>
    %224 = vector.broadcast %223 : f32 to vector<2x8x8xf32>
    %225 = arith.mulf %210, %224 : vector<2x8x8xf32>
    %226 = arith.addf %209, %225 : vector<2x8x8xf32>
    %227 = vector.extract_strided_slice %35 {offsets = [0, 1, 1], sizes = [2, 8, 8], strides = [1, 1, 1]} : vector<2x9x9xf32> to vector<2x8x8xf32>
    %c136 = arith.constant 136 : index
    %228 = memref.load %arg3[%c136] : memref<144xf32, #tpu.memory_space<smem>>
    %229 = vector.broadcast %228 : f32 to vector<2x8x8xf32>
    %230 = arith.mulf %227, %229 : vector<2x8x8xf32>
    %231 = arith.addf %214, %230 : vector<2x8x8xf32>
    %c137 = arith.constant 137 : index
    %232 = memref.load %arg3[%c137] : memref<144xf32, #tpu.memory_space<smem>>
    %233 = vector.broadcast %232 : f32 to vector<2x8x8xf32>
    %234 = arith.mulf %227, %233 : vector<2x8x8xf32>
    %235 = arith.addf %218, %234 : vector<2x8x8xf32>
    %c138 = arith.constant 138 : index
    %236 = memref.load %arg3[%c138] : memref<144xf32, #tpu.memory_space<smem>>
    %237 = vector.broadcast %236 : f32 to vector<2x8x8xf32>
    %238 = arith.mulf %227, %237 : vector<2x8x8xf32>
    %239 = arith.addf %222, %238 : vector<2x8x8xf32>
    %c139 = arith.constant 139 : index
    %240 = memref.load %arg3[%c139] : memref<144xf32, #tpu.memory_space<smem>>
    %241 = vector.broadcast %240 : f32 to vector<2x8x8xf32>
    %242 = arith.mulf %227, %241 : vector<2x8x8xf32>
    %243 = arith.addf %226, %242 : vector<2x8x8xf32>
    %244 = vector.extract_strided_slice %39 {offsets = [0, 0, 0], sizes = [2, 8, 8], strides = [1, 1, 1]} : vector<2x9x9xf32> to vector<2x8x8xf32>
    %c12 = arith.constant 12 : index
    %245 = memref.load %arg3[%c12] : memref<144xf32, #tpu.memory_space<smem>>
    %246 = vector.broadcast %245 : f32 to vector<2x8x8xf32>
    %247 = arith.mulf %244, %246 : vector<2x8x8xf32>
    %248 = arith.addf %231, %247 : vector<2x8x8xf32>
    %c13 = arith.constant 13 : index
    %249 = memref.load %arg3[%c13] : memref<144xf32, #tpu.memory_space<smem>>
    %250 = vector.broadcast %249 : f32 to vector<2x8x8xf32>
    %251 = arith.mulf %244, %250 : vector<2x8x8xf32>
    %252 = arith.addf %235, %251 : vector<2x8x8xf32>
    %c14 = arith.constant 14 : index
    %253 = memref.load %arg3[%c14] : memref<144xf32, #tpu.memory_space<smem>>
    %254 = vector.broadcast %253 : f32 to vector<2x8x8xf32>
    %255 = arith.mulf %244, %254 : vector<2x8x8xf32>
    %256 = arith.addf %239, %255 : vector<2x8x8xf32>
    %c15 = arith.constant 15 : index
    %257 = memref.load %arg3[%c15] : memref<144xf32, #tpu.memory_space<smem>>
    %258 = vector.broadcast %257 : f32 to vector<2x8x8xf32>
    %259 = arith.mulf %244, %258 : vector<2x8x8xf32>
    %260 = arith.addf %243, %259 : vector<2x8x8xf32>
    %261 = vector.extract_strided_slice %39 {offsets = [0, 0, 1], sizes = [2, 8, 8], strides = [1, 1, 1]} : vector<2x9x9xf32> to vector<2x8x8xf32>
    %c44 = arith.constant 44 : index
    %262 = memref.load %arg3[%c44] : memref<144xf32, #tpu.memory_space<smem>>
    %263 = vector.broadcast %262 : f32 to vector<2x8x8xf32>
    %264 = arith.mulf %261, %263 : vector<2x8x8xf32>
    %265 = arith.addf %248, %264 : vector<2x8x8xf32>
    %c45 = arith.constant 45 : index
    %266 = memref.load %arg3[%c45] : memref<144xf32, #tpu.memory_space<smem>>
    %267 = vector.broadcast %266 : f32 to vector<2x8x8xf32>
    %268 = arith.mulf %261, %267 : vector<2x8x8xf32>
    %269 = arith.addf %252, %268 : vector<2x8x8xf32>
    %c46 = arith.constant 46 : index
    %270 = memref.load %arg3[%c46] : memref<144xf32, #tpu.memory_space<smem>>
    %271 = vector.broadcast %270 : f32 to vector<2x8x8xf32>
    %272 = arith.mulf %261, %271 : vector<2x8x8xf32>
    %273 = arith.addf %256, %272 : vector<2x8x8xf32>
    %c47 = arith.constant 47 : index
    %274 = memref.load %arg3[%c47] : memref<144xf32, #tpu.memory_space<smem>>
    %275 = vector.broadcast %274 : f32 to vector<2x8x8xf32>
    %276 = arith.mulf %261, %275 : vector<2x8x8xf32>
    %277 = arith.addf %260, %276 : vector<2x8x8xf32>
    %278 = vector.extract_strided_slice %39 {offsets = [0, 1, 0], sizes = [2, 8, 8], strides = [1, 1, 1]} : vector<2x9x9xf32> to vector<2x8x8xf32>
    %c108 = arith.constant 108 : index
    %279 = memref.load %arg3[%c108] : memref<144xf32, #tpu.memory_space<smem>>
    %280 = vector.broadcast %279 : f32 to vector<2x8x8xf32>
    %281 = arith.mulf %278, %280 : vector<2x8x8xf32>
    %282 = arith.addf %265, %281 : vector<2x8x8xf32>
    %c109 = arith.constant 109 : index
    %283 = memref.load %arg3[%c109] : memref<144xf32, #tpu.memory_space<smem>>
    %284 = vector.broadcast %283 : f32 to vector<2x8x8xf32>
    %285 = arith.mulf %278, %284 : vector<2x8x8xf32>
    %286 = arith.addf %269, %285 : vector<2x8x8xf32>
    %c110 = arith.constant 110 : index
    %287 = memref.load %arg3[%c110] : memref<144xf32, #tpu.memory_space<smem>>
    %288 = vector.broadcast %287 : f32 to vector<2x8x8xf32>
    %289 = arith.mulf %278, %288 : vector<2x8x8xf32>
    %290 = arith.addf %273, %289 : vector<2x8x8xf32>
    %c111 = arith.constant 111 : index
    %291 = memref.load %arg3[%c111] : memref<144xf32, #tpu.memory_space<smem>>
    %292 = vector.broadcast %291 : f32 to vector<2x8x8xf32>
    %293 = arith.mulf %278, %292 : vector<2x8x8xf32>
    %294 = arith.addf %277, %293 : vector<2x8x8xf32>
    %295 = vector.extract_strided_slice %39 {offsets = [0, 1, 1], sizes = [2, 8, 8], strides = [1, 1, 1]} : vector<2x9x9xf32> to vector<2x8x8xf32>
    %c140 = arith.constant 140 : index
    %296 = memref.load %arg3[%c140] : memref<144xf32, #tpu.memory_space<smem>>
    %297 = vector.broadcast %296 : f32 to vector<2x8x8xf32>
    %298 = arith.mulf %295, %297 : vector<2x8x8xf32>
    %299 = arith.addf %282, %298 : vector<2x8x8xf32>
    %c141 = arith.constant 141 : index
    %300 = memref.load %arg3[%c141] : memref<144xf32, #tpu.memory_space<smem>>
    %301 = vector.broadcast %300 : f32 to vector<2x8x8xf32>
    %302 = arith.mulf %295, %301 : vector<2x8x8xf32>
    %303 = arith.addf %286, %302 : vector<2x8x8xf32>
    %c142 = arith.constant 142 : index
    %304 = memref.load %arg3[%c142] : memref<144xf32, #tpu.memory_space<smem>>
    %305 = vector.broadcast %304 : f32 to vector<2x8x8xf32>
    %306 = arith.mulf %295, %305 : vector<2x8x8xf32>
    %307 = arith.addf %290, %306 : vector<2x8x8xf32>
    %c143 = arith.constant 143 : index
    %308 = memref.load %arg3[%c143] : memref<144xf32, #tpu.memory_space<smem>>
    %309 = vector.broadcast %308 : f32 to vector<2x8x8xf32>
    %310 = arith.mulf %295, %309 : vector<2x8x8xf32>
    %311 = arith.addf %294, %310 : vector<2x8x8xf32>
    %c0_33 = arith.constant 0 : index
    %c0_34 = arith.constant 0 : index
    %c1_35 = arith.constant 1 : index
    %c0_36 = arith.constant 0 : index
    %c0_37 = arith.constant 0 : index
    %c0_38 = arith.constant 0 : index
    %312 = vector.load %arg1[%c0_33, %c0_34, %c1_35, %c0_36, %c0_37, %c0_38] : memref<2x2x2x4x9x9xf32, #tpu.memory_space<vmem>>, vector<2x1x1x1x9x9xf32>
    %313 = vector.shape_cast %312 : vector<2x1x1x1x9x9xf32> to vector<2x9x9xf32>
    %c0_39 = arith.constant 0 : index
    %c0_40 = arith.constant 0 : index
    %c1_41 = arith.constant 1 : index
    %c1_42 = arith.constant 1 : index
    %c0_43 = arith.constant 0 : index
    %c0_44 = arith.constant 0 : index
    %314 = vector.load %arg1[%c0_39, %c0_40, %c1_41, %c1_42, %c0_43, %c0_44] : memref<2x2x2x4x9x9xf32, #tpu.memory_space<vmem>>, vector<2x1x1x1x9x9xf32>
    %315 = vector.shape_cast %314 : vector<2x1x1x1x9x9xf32> to vector<2x9x9xf32>
    %c0_45 = arith.constant 0 : index
    %c0_46 = arith.constant 0 : index
    %c1_47 = arith.constant 1 : index
    %c2_48 = arith.constant 2 : index
    %c0_49 = arith.constant 0 : index
    %c0_50 = arith.constant 0 : index
    %316 = vector.load %arg1[%c0_45, %c0_46, %c1_47, %c2_48, %c0_49, %c0_50] : memref<2x2x2x4x9x9xf32, #tpu.memory_space<vmem>>, vector<2x1x1x1x9x9xf32>
    %317 = vector.shape_cast %316 : vector<2x1x1x1x9x9xf32> to vector<2x9x9xf32>
    %c0_51 = arith.constant 0 : index
    %c0_52 = arith.constant 0 : index
    %c1_53 = arith.constant 1 : index
    %c3_54 = arith.constant 3 : index
    %c0_55 = arith.constant 0 : index
    %c0_56 = arith.constant 0 : index
    %318 = vector.load %arg1[%c0_51, %c0_52, %c1_53, %c3_54, %c0_55, %c0_56] : memref<2x2x2x4x9x9xf32, #tpu.memory_space<vmem>>, vector<2x1x1x1x9x9xf32>
    %319 = vector.shape_cast %318 : vector<2x1x1x1x9x9xf32> to vector<2x9x9xf32>
    %320 = arith.mulf %313, %313 : vector<2x9x9xf32>
    %321 = arith.mulf %315, %315 : vector<2x9x9xf32>
    %322 = arith.addf %320, %321 : vector<2x9x9xf32>
    %323 = arith.mulf %317, %317 : vector<2x9x9xf32>
    %324 = arith.addf %322, %323 : vector<2x9x9xf32>
    %325 = arith.mulf %319, %319 : vector<2x9x9xf32>
    %326 = arith.addf %324, %325 : vector<2x9x9xf32>
    %cst_57 = arith.constant 2.500000e-01 : f32
    %327 = vector.broadcast %cst_57 : f32 to vector<2x9x9xf32>
    %328 = arith.mulf %326, %327 : vector<2x9x9xf32>
    %cst_58 = arith.constant 9.99999974E-6 : f32
    %329 = vector.broadcast %cst_58 : f32 to vector<2x9x9xf32>
    %330 = arith.addf %328, %329 : vector<2x9x9xf32>
    %331 = math.rsqrt %330 : vector<2x9x9xf32>
    %332 = arith.mulf %313, %331 : vector<2x9x9xf32>
    %c0_59 = arith.constant 0 : index
    %333 = memref.load %arg2[%c0_59] : memref<4xf32, #tpu.memory_space<smem>>
    %334 = vector.broadcast %333 : f32 to vector<2x9x9xf32>
    %335 = arith.mulf %332, %334 : vector<2x9x9xf32>
    %336 = arith.mulf %315, %331 : vector<2x9x9xf32>
    %c1_60 = arith.constant 1 : index
    %337 = memref.load %arg2[%c1_60] : memref<4xf32, #tpu.memory_space<smem>>
    %338 = vector.broadcast %337 : f32 to vector<2x9x9xf32>
    %339 = arith.mulf %336, %338 : vector<2x9x9xf32>
    %340 = arith.mulf %317, %331 : vector<2x9x9xf32>
    %c2_61 = arith.constant 2 : index
    %341 = memref.load %arg2[%c2_61] : memref<4xf32, #tpu.memory_space<smem>>
    %342 = vector.broadcast %341 : f32 to vector<2x9x9xf32>
    %343 = arith.mulf %340, %342 : vector<2x9x9xf32>
    %344 = arith.mulf %319, %331 : vector<2x9x9xf32>
    %c3_62 = arith.constant 3 : index
    %345 = memref.load %arg2[%c3_62] : memref<4xf32, #tpu.memory_space<smem>>
    %346 = vector.broadcast %345 : f32 to vector<2x9x9xf32>
    %347 = arith.mulf %344, %346 : vector<2x9x9xf32>
    %348 = vector.extract_strided_slice %335 {offsets = [0, 0, 0], sizes = [2, 8, 8], strides = [1, 1, 1]} : vector<2x9x9xf32> to vector<2x8x8xf32>
    %c16 = arith.constant 16 : index
    %349 = memref.load %arg3[%c16] : memref<144xf32, #tpu.memory_space<smem>>
    %350 = vector.broadcast %349 : f32 to vector<2x8x8xf32>
    %351 = arith.mulf %348, %350 : vector<2x8x8xf32>
    %352 = arith.addf %299, %351 : vector<2x8x8xf32>
    %c17 = arith.constant 17 : index
    %353 = memref.load %arg3[%c17] : memref<144xf32, #tpu.memory_space<smem>>
    %354 = vector.broadcast %353 : f32 to vector<2x8x8xf32>
    %355 = arith.mulf %348, %354 : vector<2x8x8xf32>
    %356 = arith.addf %303, %355 : vector<2x8x8xf32>
    %c18 = arith.constant 18 : index
    %357 = memref.load %arg3[%c18] : memref<144xf32, #tpu.memory_space<smem>>
    %358 = vector.broadcast %357 : f32 to vector<2x8x8xf32>
    %359 = arith.mulf %348, %358 : vector<2x8x8xf32>
    %360 = arith.addf %307, %359 : vector<2x8x8xf32>
    %c19 = arith.constant 19 : index
    %361 = memref.load %arg3[%c19] : memref<144xf32, #tpu.memory_space<smem>>
    %362 = vector.broadcast %361 : f32 to vector<2x8x8xf32>
    %363 = arith.mulf %348, %362 : vector<2x8x8xf32>
    %364 = arith.addf %311, %363 : vector<2x8x8xf32>
    %365 = vector.extract_strided_slice %335 {offsets = [0, 1, 0], sizes = [2, 8, 8], strides = [1, 1, 1]} : vector<2x9x9xf32> to vector<2x8x8xf32>
    %c112 = arith.constant 112 : index
    %366 = memref.load %arg3[%c112] : memref<144xf32, #tpu.memory_space<smem>>
    %367 = vector.broadcast %366 : f32 to vector<2x8x8xf32>
    %368 = arith.mulf %365, %367 : vector<2x8x8xf32>
    %369 = arith.addf %352, %368 : vector<2x8x8xf32>
    %c113 = arith.constant 113 : index
    %370 = memref.load %arg3[%c113] : memref<144xf32, #tpu.memory_space<smem>>
    %371 = vector.broadcast %370 : f32 to vector<2x8x8xf32>
    %372 = arith.mulf %365, %371 : vector<2x8x8xf32>
    %373 = arith.addf %356, %372 : vector<2x8x8xf32>
    %c114 = arith.constant 114 : index
    %374 = memref.load %arg3[%c114] : memref<144xf32, #tpu.memory_space<smem>>
    %375 = vector.broadcast %374 : f32 to vector<2x8x8xf32>
    %376 = arith.mulf %365, %375 : vector<2x8x8xf32>
    %377 = arith.addf %360, %376 : vector<2x8x8xf32>
    %c115 = arith.constant 115 : index
    %378 = memref.load %arg3[%c115] : memref<144xf32, #tpu.memory_space<smem>>
    %379 = vector.broadcast %378 : f32 to vector<2x8x8xf32>
    %380 = arith.mulf %365, %379 : vector<2x8x8xf32>
    %381 = arith.addf %364, %380 : vector<2x8x8xf32>
    %382 = vector.extract_strided_slice %339 {offsets = [0, 0, 0], sizes = [2, 8, 8], strides = [1, 1, 1]} : vector<2x9x9xf32> to vector<2x8x8xf32>
    %c20 = arith.constant 20 : index
    %383 = memref.load %arg3[%c20] : memref<144xf32, #tpu.memory_space<smem>>
    %384 = vector.broadcast %383 : f32 to vector<2x8x8xf32>
    %385 = arith.mulf %382, %384 : vector<2x8x8xf32>
    %386 = arith.addf %369, %385 : vector<2x8x8xf32>
    %c21 = arith.constant 21 : index
    %387 = memref.load %arg3[%c21] : memref<144xf32, #tpu.memory_space<smem>>
    %388 = vector.broadcast %387 : f32 to vector<2x8x8xf32>
    %389 = arith.mulf %382, %388 : vector<2x8x8xf32>
    %390 = arith.addf %373, %389 : vector<2x8x8xf32>
    %c22 = arith.constant 22 : index
    %391 = memref.load %arg3[%c22] : memref<144xf32, #tpu.memory_space<smem>>
    %392 = vector.broadcast %391 : f32 to vector<2x8x8xf32>
    %393 = arith.mulf %382, %392 : vector<2x8x8xf32>
    %394 = arith.addf %377, %393 : vector<2x8x8xf32>
    %c23 = arith.constant 23 : index
    %395 = memref.load %arg3[%c23] : memref<144xf32, #tpu.memory_space<smem>>
    %396 = vector.broadcast %395 : f32 to vector<2x8x8xf32>
    %397 = arith.mulf %382, %396 : vector<2x8x8xf32>
    %398 = arith.addf %381, %397 : vector<2x8x8xf32>
    %399 = vector.extract_strided_slice %339 {offsets = [0, 1, 0], sizes = [2, 8, 8], strides = [1, 1, 1]} : vector<2x9x9xf32> to vector<2x8x8xf32>
    %c116 = arith.constant 116 : index
    %400 = memref.load %arg3[%c116] : memref<144xf32, #tpu.memory_space<smem>>
    %401 = vector.broadcast %400 : f32 to vector<2x8x8xf32>
    %402 = arith.mulf %399, %401 : vector<2x8x8xf32>
    %403 = arith.addf %386, %402 : vector<2x8x8xf32>
    %c117 = arith.constant 117 : index
    %404 = memref.load %arg3[%c117] : memref<144xf32, #tpu.memory_space<smem>>
    %405 = vector.broadcast %404 : f32 to vector<2x8x8xf32>
    %406 = arith.mulf %399, %405 : vector<2x8x8xf32>
    %407 = arith.addf %390, %406 : vector<2x8x8xf32>
    %c118 = arith.constant 118 : index
    %408 = memref.load %arg3[%c118] : memref<144xf32, #tpu.memory_space<smem>>
    %409 = vector.broadcast %408 : f32 to vector<2x8x8xf32>
    %410 = arith.mulf %399, %409 : vector<2x8x8xf32>
    %411 = arith.addf %394, %410 : vector<2x8x8xf32>
    %c119 = arith.constant 119 : index
    %412 = memref.load %arg3[%c119] : memref<144xf32, #tpu.memory_space<smem>>
    %413 = vector.broadcast %412 : f32 to vector<2x8x8xf32>
    %414 = arith.mulf %399, %413 : vector<2x8x8xf32>
    %415 = arith.addf %398, %414 : vector<2x8x8xf32>
    %416 = vector.extract_strided_slice %343 {offsets = [0, 0, 0], sizes = [2, 8, 8], strides = [1, 1, 1]} : vector<2x9x9xf32> to vector<2x8x8xf32>
    %c24 = arith.constant 24 : index
    %417 = memref.load %arg3[%c24] : memref<144xf32, #tpu.memory_space<smem>>
    %418 = vector.broadcast %417 : f32 to vector<2x8x8xf32>
    %419 = arith.mulf %416, %418 : vector<2x8x8xf32>
    %420 = arith.addf %403, %419 : vector<2x8x8xf32>
    %c25 = arith.constant 25 : index
    %421 = memref.load %arg3[%c25] : memref<144xf32, #tpu.memory_space<smem>>
    %422 = vector.broadcast %421 : f32 to vector<2x8x8xf32>
    %423 = arith.mulf %416, %422 : vector<2x8x8xf32>
    %424 = arith.addf %407, %423 : vector<2x8x8xf32>
    %c26 = arith.constant 26 : index
    %425 = memref.load %arg3[%c26] : memref<144xf32, #tpu.memory_space<smem>>
    %426 = vector.broadcast %425 : f32 to vector<2x8x8xf32>
    %427 = arith.mulf %416, %426 : vector<2x8x8xf32>
    %428 = arith.addf %411, %427 : vector<2x8x8xf32>
    %c27 = arith.constant 27 : index
    %429 = memref.load %arg3[%c27] : memref<144xf32, #tpu.memory_space<smem>>
    %430 = vector.broadcast %429 : f32 to vector<2x8x8xf32>
    %431 = arith.mulf %416, %430 : vector<2x8x8xf32>
    %432 = arith.addf %415, %431 : vector<2x8x8xf32>
    %433 = vector.extract_strided_slice %343 {offsets = [0, 1, 0], sizes = [2, 8, 8], strides = [1, 1, 1]} : vector<2x9x9xf32> to vector<2x8x8xf32>
    %c120 = arith.constant 120 : index
    %434 = memref.load %arg3[%c120] : memref<144xf32, #tpu.memory_space<smem>>
    %435 = vector.broadcast %434 : f32 to vector<2x8x8xf32>
    %436 = arith.mulf %433, %435 : vector<2x8x8xf32>
    %437 = arith.addf %420, %436 : vector<2x8x8xf32>
    %c121 = arith.constant 121 : index
    %438 = memref.load %arg3[%c121] : memref<144xf32, #tpu.memory_space<smem>>
    %439 = vector.broadcast %438 : f32 to vector<2x8x8xf32>
    %440 = arith.mulf %433, %439 : vector<2x8x8xf32>
    %441 = arith.addf %424, %440 : vector<2x8x8xf32>
    %c122 = arith.constant 122 : index
    %442 = memref.load %arg3[%c122] : memref<144xf32, #tpu.memory_space<smem>>
    %443 = vector.broadcast %442 : f32 to vector<2x8x8xf32>
    %444 = arith.mulf %433, %443 : vector<2x8x8xf32>
    %445 = arith.addf %428, %444 : vector<2x8x8xf32>
    %c123 = arith.constant 123 : index
    %446 = memref.load %arg3[%c123] : memref<144xf32, #tpu.memory_space<smem>>
    %447 = vector.broadcast %446 : f32 to vector<2x8x8xf32>
    %448 = arith.mulf %433, %447 : vector<2x8x8xf32>
    %449 = arith.addf %432, %448 : vector<2x8x8xf32>
    %450 = vector.extract_strided_slice %347 {offsets = [0, 0, 0], sizes = [2, 8, 8], strides = [1, 1, 1]} : vector<2x9x9xf32> to vector<2x8x8xf32>
    %c28 = arith.constant 28 : index
    %451 = memref.load %arg3[%c28] : memref<144xf32, #tpu.memory_space<smem>>
    %452 = vector.broadcast %451 : f32 to vector<2x8x8xf32>
    %453 = arith.mulf %450, %452 : vector<2x8x8xf32>
    %454 = arith.addf %437, %453 : vector<2x8x8xf32>
    %c29 = arith.constant 29 : index
    %455 = memref.load %arg3[%c29] : memref<144xf32, #tpu.memory_space<smem>>
    %456 = vector.broadcast %455 : f32 to vector<2x8x8xf32>
    %457 = arith.mulf %450, %456 : vector<2x8x8xf32>
    %458 = arith.addf %441, %457 : vector<2x8x8xf32>
    %c30 = arith.constant 30 : index
    %459 = memref.load %arg3[%c30] : memref<144xf32, #tpu.memory_space<smem>>
    %460 = vector.broadcast %459 : f32 to vector<2x8x8xf32>
    %461 = arith.mulf %450, %460 : vector<2x8x8xf32>
    %462 = arith.addf %445, %461 : vector<2x8x8xf32>
    %c31 = arith.constant 31 : index
    %463 = memref.load %arg3[%c31] : memref<144xf32, #tpu.memory_space<smem>>
    %464 = vector.broadcast %463 : f32 to vector<2x8x8xf32>
    %465 = arith.mulf %450, %464 : vector<2x8x8xf32>
    %466 = arith.addf %449, %465 : vector<2x8x8xf32>
    %467 = vector.extract_strided_slice %347 {offsets = [0, 1, 0], sizes = [2, 8, 8], strides = [1, 1, 1]} : vector<2x9x9xf32> to vector<2x8x8xf32>
    %c124 = arith.constant 124 : index
    %468 = memref.load %arg3[%c124] : memref<144xf32, #tpu.memory_space<smem>>
    %469 = vector.broadcast %468 : f32 to vector<2x8x8xf32>
    %470 = arith.mulf %467, %469 : vector<2x8x8xf32>
    %471 = arith.addf %454, %470 : vector<2x8x8xf32>
    %c125 = arith.constant 125 : index
    %472 = memref.load %arg3[%c125] : memref<144xf32, #tpu.memory_space<smem>>
    %473 = vector.broadcast %472 : f32 to vector<2x8x8xf32>
    %474 = arith.mulf %467, %473 : vector<2x8x8xf32>
    %475 = arith.addf %458, %474 : vector<2x8x8xf32>
    %c126 = arith.constant 126 : index
    %476 = memref.load %arg3[%c126] : memref<144xf32, #tpu.memory_space<smem>>
    %477 = vector.broadcast %476 : f32 to vector<2x8x8xf32>
    %478 = arith.mulf %467, %477 : vector<2x8x8xf32>
    %479 = arith.addf %462, %478 : vector<2x8x8xf32>
    %c127 = arith.constant 127 : index
    %480 = memref.load %arg3[%c127] : memref<144xf32, #tpu.memory_space<smem>>
    %481 = vector.broadcast %480 : f32 to vector<2x8x8xf32>
    %482 = arith.mulf %467, %481 : vector<2x8x8xf32>
    %483 = arith.addf %466, %482 : vector<2x8x8xf32>
    %c0_63 = arith.constant 0 : index
    %c1_64 = arith.constant 1 : index
    %c0_65 = arith.constant 0 : index
    %c0_66 = arith.constant 0 : index
    %c0_67 = arith.constant 0 : index
    %c0_68 = arith.constant 0 : index
    %484 = vector.load %arg1[%c0_63, %c1_64, %c0_65, %c0_66, %c0_67, %c0_68] : memref<2x2x2x4x9x9xf32, #tpu.memory_space<vmem>>, vector<2x1x1x1x9x9xf32>
    %485 = vector.shape_cast %484 : vector<2x1x1x1x9x9xf32> to vector<2x9x9xf32>
    %c0_69 = arith.constant 0 : index
    %c1_70 = arith.constant 1 : index
    %c0_71 = arith.constant 0 : index
    %c1_72 = arith.constant 1 : index
    %c0_73 = arith.constant 0 : index
    %c0_74 = arith.constant 0 : index
    %486 = vector.load %arg1[%c0_69, %c1_70, %c0_71, %c1_72, %c0_73, %c0_74] : memref<2x2x2x4x9x9xf32, #tpu.memory_space<vmem>>, vector<2x1x1x1x9x9xf32>
    %487 = vector.shape_cast %486 : vector<2x1x1x1x9x9xf32> to vector<2x9x9xf32>
    %c0_75 = arith.constant 0 : index
    %c1_76 = arith.constant 1 : index
    %c0_77 = arith.constant 0 : index
    %c2_78 = arith.constant 2 : index
    %c0_79 = arith.constant 0 : index
    %c0_80 = arith.constant 0 : index
    %488 = vector.load %arg1[%c0_75, %c1_76, %c0_77, %c2_78, %c0_79, %c0_80] : memref<2x2x2x4x9x9xf32, #tpu.memory_space<vmem>>, vector<2x1x1x1x9x9xf32>
    %489 = vector.shape_cast %488 : vector<2x1x1x1x9x9xf32> to vector<2x9x9xf32>
    %c0_81 = arith.constant 0 : index
    %c1_82 = arith.constant 1 : index
    %c0_83 = arith.constant 0 : index
    %c3_84 = arith.constant 3 : index
    %c0_85 = arith.constant 0 : index
    %c0_86 = arith.constant 0 : index
    %490 = vector.load %arg1[%c0_81, %c1_82, %c0_83, %c3_84, %c0_85, %c0_86] : memref<2x2x2x4x9x9xf32, #tpu.memory_space<vmem>>, vector<2x1x1x1x9x9xf32>
    %491 = vector.shape_cast %490 : vector<2x1x1x1x9x9xf32> to vector<2x9x9xf32>
    %492 = arith.mulf %485, %485 : vector<2x9x9xf32>
    %493 = arith.mulf %487, %487 : vector<2x9x9xf32>
    %494 = arith.addf %492, %493 : vector<2x9x9xf32>
    %495 = arith.mulf %489, %489 : vector<2x9x9xf32>
    %496 = arith.addf %494, %495 : vector<2x9x9xf32>
    %497 = arith.mulf %491, %491 : vector<2x9x9xf32>
    %498 = arith.addf %496, %497 : vector<2x9x9xf32>
    %cst_87 = arith.constant 2.500000e-01 : f32
    %499 = vector.broadcast %cst_87 : f32 to vector<2x9x9xf32>
    %500 = arith.mulf %498, %499 : vector<2x9x9xf32>
    %cst_88 = arith.constant 9.99999974E-6 : f32
    %501 = vector.broadcast %cst_88 : f32 to vector<2x9x9xf32>
    %502 = arith.addf %500, %501 : vector<2x9x9xf32>
    %503 = math.rsqrt %502 : vector<2x9x9xf32>
    %504 = arith.mulf %485, %503 : vector<2x9x9xf32>
    %c0_89 = arith.constant 0 : index
    %505 = memref.load %arg2[%c0_89] : memref<4xf32, #tpu.memory_space<smem>>
    %506 = vector.broadcast %505 : f32 to vector<2x9x9xf32>
    %507 = arith.mulf %504, %506 : vector<2x9x9xf32>
    %508 = arith.mulf %487, %503 : vector<2x9x9xf32>
    %c1_90 = arith.constant 1 : index
    %509 = memref.load %arg2[%c1_90] : memref<4xf32, #tpu.memory_space<smem>>
    %510 = vector.broadcast %509 : f32 to vector<2x9x9xf32>
    %511 = arith.mulf %508, %510 : vector<2x9x9xf32>
    %512 = arith.mulf %489, %503 : vector<2x9x9xf32>
    %c2_91 = arith.constant 2 : index
    %513 = memref.load %arg2[%c2_91] : memref<4xf32, #tpu.memory_space<smem>>
    %514 = vector.broadcast %513 : f32 to vector<2x9x9xf32>
    %515 = arith.mulf %512, %514 : vector<2x9x9xf32>
    %516 = arith.mulf %491, %503 : vector<2x9x9xf32>
    %c3_92 = arith.constant 3 : index
    %517 = memref.load %arg2[%c3_92] : memref<4xf32, #tpu.memory_space<smem>>
    %518 = vector.broadcast %517 : f32 to vector<2x9x9xf32>
    %519 = arith.mulf %516, %518 : vector<2x9x9xf32>
    %520 = vector.extract_strided_slice %507 {offsets = [0, 0, 0], sizes = [2, 8, 8], strides = [1, 1, 1]} : vector<2x9x9xf32> to vector<2x8x8xf32>
    %c48 = arith.constant 48 : index
    %521 = memref.load %arg3[%c48] : memref<144xf32, #tpu.memory_space<smem>>
    %522 = vector.broadcast %521 : f32 to vector<2x8x8xf32>
    %523 = arith.mulf %520, %522 : vector<2x8x8xf32>
    %524 = arith.addf %471, %523 : vector<2x8x8xf32>
    %c49 = arith.constant 49 : index
    %525 = memref.load %arg3[%c49] : memref<144xf32, #tpu.memory_space<smem>>
    %526 = vector.broadcast %525 : f32 to vector<2x8x8xf32>
    %527 = arith.mulf %520, %526 : vector<2x8x8xf32>
    %528 = arith.addf %475, %527 : vector<2x8x8xf32>
    %c50 = arith.constant 50 : index
    %529 = memref.load %arg3[%c50] : memref<144xf32, #tpu.memory_space<smem>>
    %530 = vector.broadcast %529 : f32 to vector<2x8x8xf32>
    %531 = arith.mulf %520, %530 : vector<2x8x8xf32>
    %532 = arith.addf %479, %531 : vector<2x8x8xf32>
    %c51 = arith.constant 51 : index
    %533 = memref.load %arg3[%c51] : memref<144xf32, #tpu.memory_space<smem>>
    %534 = vector.broadcast %533 : f32 to vector<2x8x8xf32>
    %535 = arith.mulf %520, %534 : vector<2x8x8xf32>
    %536 = arith.addf %483, %535 : vector<2x8x8xf32>
    %537 = vector.extract_strided_slice %507 {offsets = [0, 0, 1], sizes = [2, 8, 8], strides = [1, 1, 1]} : vector<2x9x9xf32> to vector<2x8x8xf32>
    %c80 = arith.constant 80 : index
    %538 = memref.load %arg3[%c80] : memref<144xf32, #tpu.memory_space<smem>>
    %539 = vector.broadcast %538 : f32 to vector<2x8x8xf32>
    %540 = arith.mulf %537, %539 : vector<2x8x8xf32>
    %541 = arith.addf %524, %540 : vector<2x8x8xf32>
    %c81 = arith.constant 81 : index
    %542 = memref.load %arg3[%c81] : memref<144xf32, #tpu.memory_space<smem>>
    %543 = vector.broadcast %542 : f32 to vector<2x8x8xf32>
    %544 = arith.mulf %537, %543 : vector<2x8x8xf32>
    %545 = arith.addf %528, %544 : vector<2x8x8xf32>
    %c82 = arith.constant 82 : index
    %546 = memref.load %arg3[%c82] : memref<144xf32, #tpu.memory_space<smem>>
    %547 = vector.broadcast %546 : f32 to vector<2x8x8xf32>
    %548 = arith.mulf %537, %547 : vector<2x8x8xf32>
    %549 = arith.addf %532, %548 : vector<2x8x8xf32>
    %c83 = arith.constant 83 : index
    %550 = memref.load %arg3[%c83] : memref<144xf32, #tpu.memory_space<smem>>
    %551 = vector.broadcast %550 : f32 to vector<2x8x8xf32>
    %552 = arith.mulf %537, %551 : vector<2x8x8xf32>
    %553 = arith.addf %536, %552 : vector<2x8x8xf32>
    %554 = vector.extract_strided_slice %511 {offsets = [0, 0, 0], sizes = [2, 8, 8], strides = [1, 1, 1]} : vector<2x9x9xf32> to vector<2x8x8xf32>
    %c52 = arith.constant 52 : index
    %555 = memref.load %arg3[%c52] : memref<144xf32, #tpu.memory_space<smem>>
    %556 = vector.broadcast %555 : f32 to vector<2x8x8xf32>
    %557 = arith.mulf %554, %556 : vector<2x8x8xf32>
    %558 = arith.addf %541, %557 : vector<2x8x8xf32>
    %c53 = arith.constant 53 : index
    %559 = memref.load %arg3[%c53] : memref<144xf32, #tpu.memory_space<smem>>
    %560 = vector.broadcast %559 : f32 to vector<2x8x8xf32>
    %561 = arith.mulf %554, %560 : vector<2x8x8xf32>
    %562 = arith.addf %545, %561 : vector<2x8x8xf32>
    %c54 = arith.constant 54 : index
    %563 = memref.load %arg3[%c54] : memref<144xf32, #tpu.memory_space<smem>>
    %564 = vector.broadcast %563 : f32 to vector<2x8x8xf32>
    %565 = arith.mulf %554, %564 : vector<2x8x8xf32>
    %566 = arith.addf %549, %565 : vector<2x8x8xf32>
    %c55 = arith.constant 55 : index
    %567 = memref.load %arg3[%c55] : memref<144xf32, #tpu.memory_space<smem>>
    %568 = vector.broadcast %567 : f32 to vector<2x8x8xf32>
    %569 = arith.mulf %554, %568 : vector<2x8x8xf32>
    %570 = arith.addf %553, %569 : vector<2x8x8xf32>
    %571 = vector.extract_strided_slice %511 {offsets = [0, 0, 1], sizes = [2, 8, 8], strides = [1, 1, 1]} : vector<2x9x9xf32> to vector<2x8x8xf32>
    %c84 = arith.constant 84 : index
    %572 = memref.load %arg3[%c84] : memref<144xf32, #tpu.memory_space<smem>>
    %573 = vector.broadcast %572 : f32 to vector<2x8x8xf32>
    %574 = arith.mulf %571, %573 : vector<2x8x8xf32>
    %575 = arith.addf %558, %574 : vector<2x8x8xf32>
    %c85 = arith.constant 85 : index
    %576 = memref.load %arg3[%c85] : memref<144xf32, #tpu.memory_space<smem>>
    %577 = vector.broadcast %576 : f32 to vector<2x8x8xf32>
    %578 = arith.mulf %571, %577 : vector<2x8x8xf32>
    %579 = arith.addf %562, %578 : vector<2x8x8xf32>
    %c86 = arith.constant 86 : index
    %580 = memref.load %arg3[%c86] : memref<144xf32, #tpu.memory_space<smem>>
    %581 = vector.broadcast %580 : f32 to vector<2x8x8xf32>
    %582 = arith.mulf %571, %581 : vector<2x8x8xf32>
    %583 = arith.addf %566, %582 : vector<2x8x8xf32>
    %c87 = arith.constant 87 : index
    %584 = memref.load %arg3[%c87] : memref<144xf32, #tpu.memory_space<smem>>
    %585 = vector.broadcast %584 : f32 to vector<2x8x8xf32>
    %586 = arith.mulf %571, %585 : vector<2x8x8xf32>
    %587 = arith.addf %570, %586 : vector<2x8x8xf32>
    %588 = vector.extract_strided_slice %515 {offsets = [0, 0, 0], sizes = [2, 8, 8], strides = [1, 1, 1]} : vector<2x9x9xf32> to vector<2x8x8xf32>
    %c56 = arith.constant 56 : index
    %589 = memref.load %arg3[%c56] : memref<144xf32, #tpu.memory_space<smem>>
    %590 = vector.broadcast %589 : f32 to vector<2x8x8xf32>
    %591 = arith.mulf %588, %590 : vector<2x8x8xf32>
    %592 = arith.addf %575, %591 : vector<2x8x8xf32>
    %c57 = arith.constant 57 : index
    %593 = memref.load %arg3[%c57] : memref<144xf32, #tpu.memory_space<smem>>
    %594 = vector.broadcast %593 : f32 to vector<2x8x8xf32>
    %595 = arith.mulf %588, %594 : vector<2x8x8xf32>
    %596 = arith.addf %579, %595 : vector<2x8x8xf32>
    %c58 = arith.constant 58 : index
    %597 = memref.load %arg3[%c58] : memref<144xf32, #tpu.memory_space<smem>>
    %598 = vector.broadcast %597 : f32 to vector<2x8x8xf32>
    %599 = arith.mulf %588, %598 : vector<2x8x8xf32>
    %600 = arith.addf %583, %599 : vector<2x8x8xf32>
    %c59 = arith.constant 59 : index
    %601 = memref.load %arg3[%c59] : memref<144xf32, #tpu.memory_space<smem>>
    %602 = vector.broadcast %601 : f32 to vector<2x8x8xf32>
    %603 = arith.mulf %588, %602 : vector<2x8x8xf32>
    %604 = arith.addf %587, %603 : vector<2x8x8xf32>
    %605 = vector.extract_strided_slice %515 {offsets = [0, 0, 1], sizes = [2, 8, 8], strides = [1, 1, 1]} : vector<2x9x9xf32> to vector<2x8x8xf32>
    %c88 = arith.constant 88 : index
    %606 = memref.load %arg3[%c88] : memref<144xf32, #tpu.memory_space<smem>>
    %607 = vector.broadcast %606 : f32 to vector<2x8x8xf32>
    %608 = arith.mulf %605, %607 : vector<2x8x8xf32>
    %609 = arith.addf %592, %608 : vector<2x8x8xf32>
    %c89 = arith.constant 89 : index
    %610 = memref.load %arg3[%c89] : memref<144xf32, #tpu.memory_space<smem>>
    %611 = vector.broadcast %610 : f32 to vector<2x8x8xf32>
    %612 = arith.mulf %605, %611 : vector<2x8x8xf32>
    %613 = arith.addf %596, %612 : vector<2x8x8xf32>
    %c90 = arith.constant 90 : index
    %614 = memref.load %arg3[%c90] : memref<144xf32, #tpu.memory_space<smem>>
    %615 = vector.broadcast %614 : f32 to vector<2x8x8xf32>
    %616 = arith.mulf %605, %615 : vector<2x8x8xf32>
    %617 = arith.addf %600, %616 : vector<2x8x8xf32>
    %c91 = arith.constant 91 : index
    %618 = memref.load %arg3[%c91] : memref<144xf32, #tpu.memory_space<smem>>
    %619 = vector.broadcast %618 : f32 to vector<2x8x8xf32>
    %620 = arith.mulf %605, %619 : vector<2x8x8xf32>
    %621 = arith.addf %604, %620 : vector<2x8x8xf32>
    %622 = vector.extract_strided_slice %519 {offsets = [0, 0, 0], sizes = [2, 8, 8], strides = [1, 1, 1]} : vector<2x9x9xf32> to vector<2x8x8xf32>
    %c60 = arith.constant 60 : index
    %623 = memref.load %arg3[%c60] : memref<144xf32, #tpu.memory_space<smem>>
    %624 = vector.broadcast %623 : f32 to vector<2x8x8xf32>
    %625 = arith.mulf %622, %624 : vector<2x8x8xf32>
    %626 = arith.addf %609, %625 : vector<2x8x8xf32>
    %c61 = arith.constant 61 : index
    %627 = memref.load %arg3[%c61] : memref<144xf32, #tpu.memory_space<smem>>
    %628 = vector.broadcast %627 : f32 to vector<2x8x8xf32>
    %629 = arith.mulf %622, %628 : vector<2x8x8xf32>
    %630 = arith.addf %613, %629 : vector<2x8x8xf32>
    %c62 = arith.constant 62 : index
    %631 = memref.load %arg3[%c62] : memref<144xf32, #tpu.memory_space<smem>>
    %632 = vector.broadcast %631 : f32 to vector<2x8x8xf32>
    %633 = arith.mulf %622, %632 : vector<2x8x8xf32>
    %634 = arith.addf %617, %633 : vector<2x8x8xf32>
    %c63 = arith.constant 63 : index
    %635 = memref.load %arg3[%c63] : memref<144xf32, #tpu.memory_space<smem>>
    %636 = vector.broadcast %635 : f32 to vector<2x8x8xf32>
    %637 = arith.mulf %622, %636 : vector<2x8x8xf32>
    %638 = arith.addf %621, %637 : vector<2x8x8xf32>
    %639 = vector.extract_strided_slice %519 {offsets = [0, 0, 1], sizes = [2, 8, 8], strides = [1, 1, 1]} : vector<2x9x9xf32> to vector<2x8x8xf32>
    %c92 = arith.constant 92 : index
    %640 = memref.load %arg3[%c92] : memref<144xf32, #tpu.memory_space<smem>>
    %641 = vector.broadcast %640 : f32 to vector<2x8x8xf32>
    %642 = arith.mulf %639, %641 : vector<2x8x8xf32>
    %643 = arith.addf %626, %642 : vector<2x8x8xf32>
    %c93 = arith.constant 93 : index
    %644 = memref.load %arg3[%c93] : memref<144xf32, #tpu.memory_space<smem>>
    %645 = vector.broadcast %644 : f32 to vector<2x8x8xf32>
    %646 = arith.mulf %639, %645 : vector<2x8x8xf32>
    %647 = arith.addf %630, %646 : vector<2x8x8xf32>
    %c94 = arith.constant 94 : index
    %648 = memref.load %arg3[%c94] : memref<144xf32, #tpu.memory_space<smem>>
    %649 = vector.broadcast %648 : f32 to vector<2x8x8xf32>
    %650 = arith.mulf %639, %649 : vector<2x8x8xf32>
    %651 = arith.addf %634, %650 : vector<2x8x8xf32>
    %c95 = arith.constant 95 : index
    %652 = memref.load %arg3[%c95] : memref<144xf32, #tpu.memory_space<smem>>
    %653 = vector.broadcast %652 : f32 to vector<2x8x8xf32>
    %654 = arith.mulf %639, %653 : vector<2x8x8xf32>
    %655 = arith.addf %638, %654 : vector<2x8x8xf32>
    %c0_93 = arith.constant 0 : index
    %c1_94 = arith.constant 1 : index
    %c1_95 = arith.constant 1 : index
    %c0_96 = arith.constant 0 : index
    %c0_97 = arith.constant 0 : index
    %c0_98 = arith.constant 0 : index
    %656 = vector.load %arg1[%c0_93, %c1_94, %c1_95, %c0_96, %c0_97, %c0_98] : memref<2x2x2x4x9x9xf32, #tpu.memory_space<vmem>>, vector<2x1x1x1x9x9xf32>
    %657 = vector.shape_cast %656 : vector<2x1x1x1x9x9xf32> to vector<2x9x9xf32>
    %c0_99 = arith.constant 0 : index
    %c1_100 = arith.constant 1 : index
    %c1_101 = arith.constant 1 : index
    %c1_102 = arith.constant 1 : index
    %c0_103 = arith.constant 0 : index
    %c0_104 = arith.constant 0 : index
    %658 = vector.load %arg1[%c0_99, %c1_100, %c1_101, %c1_102, %c0_103, %c0_104] : memref<2x2x2x4x9x9xf32, #tpu.memory_space<vmem>>, vector<2x1x1x1x9x9xf32>
    %659 = vector.shape_cast %658 : vector<2x1x1x1x9x9xf32> to vector<2x9x9xf32>
    %c0_105 = arith.constant 0 : index
    %c1_106 = arith.constant 1 : index
    %c1_107 = arith.constant 1 : index
    %c2_108 = arith.constant 2 : index
    %c0_109 = arith.constant 0 : index
    %c0_110 = arith.constant 0 : index
    %660 = vector.load %arg1[%c0_105, %c1_106, %c1_107, %c2_108, %c0_109, %c0_110] : memref<2x2x2x4x9x9xf32, #tpu.memory_space<vmem>>, vector<2x1x1x1x9x9xf32>
    %661 = vector.shape_cast %660 : vector<2x1x1x1x9x9xf32> to vector<2x9x9xf32>
    %c0_111 = arith.constant 0 : index
    %c1_112 = arith.constant 1 : index
    %c1_113 = arith.constant 1 : index
    %c3_114 = arith.constant 3 : index
    %c0_115 = arith.constant 0 : index
    %c0_116 = arith.constant 0 : index
    %662 = vector.load %arg1[%c0_111, %c1_112, %c1_113, %c3_114, %c0_115, %c0_116] : memref<2x2x2x4x9x9xf32, #tpu.memory_space<vmem>>, vector<2x1x1x1x9x9xf32>
    %663 = vector.shape_cast %662 : vector<2x1x1x1x9x9xf32> to vector<2x9x9xf32>
    %664 = arith.mulf %657, %657 : vector<2x9x9xf32>
    %665 = arith.mulf %659, %659 : vector<2x9x9xf32>
    %666 = arith.addf %664, %665 : vector<2x9x9xf32>
    %667 = arith.mulf %661, %661 : vector<2x9x9xf32>
    %668 = arith.addf %666, %667 : vector<2x9x9xf32>
    %669 = arith.mulf %663, %663 : vector<2x9x9xf32>
    %670 = arith.addf %668, %669 : vector<2x9x9xf32>
    %cst_117 = arith.constant 2.500000e-01 : f32
    %671 = vector.broadcast %cst_117 : f32 to vector<2x9x9xf32>
    %672 = arith.mulf %670, %671 : vector<2x9x9xf32>
    %cst_118 = arith.constant 9.99999974E-6 : f32
    %673 = vector.broadcast %cst_118 : f32 to vector<2x9x9xf32>
    %674 = arith.addf %672, %673 : vector<2x9x9xf32>
    %675 = math.rsqrt %674 : vector<2x9x9xf32>
    %676 = arith.mulf %657, %675 : vector<2x9x9xf32>
    %c0_119 = arith.constant 0 : index
    %677 = memref.load %arg2[%c0_119] : memref<4xf32, #tpu.memory_space<smem>>
    %678 = vector.broadcast %677 : f32 to vector<2x9x9xf32>
    %679 = arith.mulf %676, %678 : vector<2x9x9xf32>
    %680 = arith.mulf %659, %675 : vector<2x9x9xf32>
    %c1_120 = arith.constant 1 : index
    %681 = memref.load %arg2[%c1_120] : memref<4xf32, #tpu.memory_space<smem>>
    %682 = vector.broadcast %681 : f32 to vector<2x9x9xf32>
    %683 = arith.mulf %680, %682 : vector<2x9x9xf32>
    %684 = arith.mulf %661, %675 : vector<2x9x9xf32>
    %c2_121 = arith.constant 2 : index
    %685 = memref.load %arg2[%c2_121] : memref<4xf32, #tpu.memory_space<smem>>
    %686 = vector.broadcast %685 : f32 to vector<2x9x9xf32>
    %687 = arith.mulf %684, %686 : vector<2x9x9xf32>
    %688 = arith.mulf %663, %675 : vector<2x9x9xf32>
    %c3_122 = arith.constant 3 : index
    %689 = memref.load %arg2[%c3_122] : memref<4xf32, #tpu.memory_space<smem>>
    %690 = vector.broadcast %689 : f32 to vector<2x9x9xf32>
    %691 = arith.mulf %688, %690 : vector<2x9x9xf32>
    %692 = vector.extract_strided_slice %679 {offsets = [0, 0, 0], sizes = [2, 8, 8], strides = [1, 1, 1]} : vector<2x9x9xf32> to vector<2x8x8xf32>
    %c64 = arith.constant 64 : index
    %693 = memref.load %arg3[%c64] : memref<144xf32, #tpu.memory_space<smem>>
    %694 = vector.broadcast %693 : f32 to vector<2x8x8xf32>
    %695 = arith.mulf %692, %694 : vector<2x8x8xf32>
    %696 = arith.addf %643, %695 : vector<2x8x8xf32>
    %c65 = arith.constant 65 : index
    %697 = memref.load %arg3[%c65] : memref<144xf32, #tpu.memory_space<smem>>
    %698 = vector.broadcast %697 : f32 to vector<2x8x8xf32>
    %699 = arith.mulf %692, %698 : vector<2x8x8xf32>
    %700 = arith.addf %647, %699 : vector<2x8x8xf32>
    %c66 = arith.constant 66 : index
    %701 = memref.load %arg3[%c66] : memref<144xf32, #tpu.memory_space<smem>>
    %702 = vector.broadcast %701 : f32 to vector<2x8x8xf32>
    %703 = arith.mulf %692, %702 : vector<2x8x8xf32>
    %704 = arith.addf %651, %703 : vector<2x8x8xf32>
    %c67 = arith.constant 67 : index
    %705 = memref.load %arg3[%c67] : memref<144xf32, #tpu.memory_space<smem>>
    %706 = vector.broadcast %705 : f32 to vector<2x8x8xf32>
    %707 = arith.mulf %692, %706 : vector<2x8x8xf32>
    %708 = arith.addf %655, %707 : vector<2x8x8xf32>
    %709 = vector.extract_strided_slice %683 {offsets = [0, 0, 0], sizes = [2, 8, 8], strides = [1, 1, 1]} : vector<2x9x9xf32> to vector<2x8x8xf32>
    %c68 = arith.constant 68 : index
    %710 = memref.load %arg3[%c68] : memref<144xf32, #tpu.memory_space<smem>>
    %711 = vector.broadcast %710 : f32 to vector<2x8x8xf32>
    %712 = arith.mulf %709, %711 : vector<2x8x8xf32>
    %713 = arith.addf %696, %712 : vector<2x8x8xf32>
    %c69 = arith.constant 69 : index
    %714 = memref.load %arg3[%c69] : memref<144xf32, #tpu.memory_space<smem>>
    %715 = vector.broadcast %714 : f32 to vector<2x8x8xf32>
    %716 = arith.mulf %709, %715 : vector<2x8x8xf32>
    %717 = arith.addf %700, %716 : vector<2x8x8xf32>
    %c70 = arith.constant 70 : index
    %718 = memref.load %arg3[%c70] : memref<144xf32, #tpu.memory_space<smem>>
    %719 = vector.broadcast %718 : f32 to vector<2x8x8xf32>
    %720 = arith.mulf %709, %719 : vector<2x8x8xf32>
    %721 = arith.addf %704, %720 : vector<2x8x8xf32>
    %c71 = arith.constant 71 : index
    %722 = memref.load %arg3[%c71] : memref<144xf32, #tpu.memory_space<smem>>
    %723 = vector.broadcast %722 : f32 to vector<2x8x8xf32>
    %724 = arith.mulf %709, %723 : vector<2x8x8xf32>
    %725 = arith.addf %708, %724 : vector<2x8x8xf32>
    %726 = vector.extract_strided_slice %687 {offsets = [0, 0, 0], sizes = [2, 8, 8], strides = [1, 1, 1]} : vector<2x9x9xf32> to vector<2x8x8xf32>
    %c72 = arith.constant 72 : index
    %727 = memref.load %arg3[%c72] : memref<144xf32, #tpu.memory_space<smem>>
    %728 = vector.broadcast %727 : f32 to vector<2x8x8xf32>
    %729 = arith.mulf %726, %728 : vector<2x8x8xf32>
    %730 = arith.addf %713, %729 : vector<2x8x8xf32>
    %c73 = arith.constant 73 : index
    %731 = memref.load %arg3[%c73] : memref<144xf32, #tpu.memory_space<smem>>
    %732 = vector.broadcast %731 : f32 to vector<2x8x8xf32>
    %733 = arith.mulf %726, %732 : vector<2x8x8xf32>
    %734 = arith.addf %717, %733 : vector<2x8x8xf32>
    %c74 = arith.constant 74 : index
    %735 = memref.load %arg3[%c74] : memref<144xf32, #tpu.memory_space<smem>>
    %736 = vector.broadcast %735 : f32 to vector<2x8x8xf32>
    %737 = arith.mulf %726, %736 : vector<2x8x8xf32>
    %738 = arith.addf %721, %737 : vector<2x8x8xf32>
    %c75 = arith.constant 75 : index
    %739 = memref.load %arg3[%c75] : memref<144xf32, #tpu.memory_space<smem>>
    %740 = vector.broadcast %739 : f32 to vector<2x8x8xf32>
    %741 = arith.mulf %726, %740 : vector<2x8x8xf32>
    %742 = arith.addf %725, %741 : vector<2x8x8xf32>
    %743 = vector.extract_strided_slice %691 {offsets = [0, 0, 0], sizes = [2, 8, 8], strides = [1, 1, 1]} : vector<2x9x9xf32> to vector<2x8x8xf32>
    %c76 = arith.constant 76 : index
    %744 = memref.load %arg3[%c76] : memref<144xf32, #tpu.memory_space<smem>>
    %745 = vector.broadcast %744 : f32 to vector<2x8x8xf32>
    %746 = arith.mulf %743, %745 : vector<2x8x8xf32>
    %747 = arith.addf %730, %746 : vector<2x8x8xf32>
    %c77 = arith.constant 77 : index
    %748 = memref.load %arg3[%c77] : memref<144xf32, #tpu.memory_space<smem>>
    %749 = vector.broadcast %748 : f32 to vector<2x8x8xf32>
    %750 = arith.mulf %743, %749 : vector<2x8x8xf32>
    %751 = arith.addf %734, %750 : vector<2x8x8xf32>
    %c78 = arith.constant 78 : index
    %752 = memref.load %arg3[%c78] : memref<144xf32, #tpu.memory_space<smem>>
    %753 = vector.broadcast %752 : f32 to vector<2x8x8xf32>
    %754 = arith.mulf %743, %753 : vector<2x8x8xf32>
    %755 = arith.addf %738, %754 : vector<2x8x8xf32>
    %c79 = arith.constant 79 : index
    %756 = memref.load %arg3[%c79] : memref<144xf32, #tpu.memory_space<smem>>
    %757 = vector.broadcast %756 : f32 to vector<2x8x8xf32>
    %758 = arith.mulf %743, %757 : vector<2x8x8xf32>
    %759 = arith.addf %742, %758 : vector<2x8x8xf32>
    %c0_123 = arith.constant 0 : index
    %760 = memref.load %arg4[%c0_123] : memref<4xf32, #tpu.memory_space<smem>>
    %761 = vector.broadcast %760 : f32 to vector<2x8x8xf32>
    %762 = arith.addf %747, %761 : vector<2x8x8xf32>
    %c0_124 = arith.constant 0 : index
    %c0_125 = arith.constant 0 : index
    %c0_126 = arith.constant 0 : index
    %c0_127 = arith.constant 0 : index
    %763 = vector.load %arg5[%c0_124, %c0_125, %c0_126, %c0_127] : memref<2x4x8x8xf32, #tpu.memory_space<vmem>>, vector<2x1x8x8xf32>
    %764 = vector.shape_cast %763 : vector<2x1x8x8xf32> to vector<2x8x8xf32>
    %765 = vector.shape_cast %762 : vector<2x8x8xf32> to vector<2x1x8x8xf32>
    tpu.vector_store %arg5[%c0_124, %c0_125, %c0_126, %c0_127], %765 {strides = array<i32>} : memref<2x4x8x8xf32, #tpu.memory_space<vmem>>, vector<2x1x8x8xf32>,
    %c1_128 = arith.constant 1 : index
    %766 = memref.load %arg4[%c1_128] : memref<4xf32, #tpu.memory_space<smem>>
    %767 = vector.broadcast %766 : f32 to vector<2x8x8xf32>
    %768 = arith.addf %751, %767 : vector<2x8x8xf32>
    %c0_129 = arith.constant 0 : index
    %c1_130 = arith.constant 1 : index
    %c0_131 = arith.constant 0 : index
    %c0_132 = arith.constant 0 : index
    %769 = vector.load %arg5[%c0_129, %c1_130, %c0_131, %c0_132] : memref<2x4x8x8xf32, #tpu.memory_space<vmem>>, vector<2x1x8x8xf32>
    %770 = vector.shape_cast %769 : vector<2x1x8x8xf32> to vector<2x8x8xf32>
    %771 = vector.shape_cast %768 : vector<2x8x8xf32> to vector<2x1x8x8xf32>
    tpu.vector_store %arg5[%c0_129, %c1_130, %c0_131, %c0_132], %771 {strides = array<i32>} : memref<2x4x8x8xf32, #tpu.memory_space<vmem>>, vector<2x1x8x8xf32>,
    %c2_133 = arith.constant 2 : index
    %772 = memref.load %arg4[%c2_133] : memref<4xf32, #tpu.memory_space<smem>>
    %773 = vector.broadcast %772 : f32 to vector<2x8x8xf32>
    %774 = arith.addf %755, %773 : vector<2x8x8xf32>
    %c0_134 = arith.constant 0 : index
    %c2_135 = arith.constant 2 : index
    %c0_136 = arith.constant 0 : index
    %c0_137 = arith.constant 0 : index
    %775 = vector.load %arg5[%c0_134, %c2_135, %c0_136, %c0_137] : memref<2x4x8x8xf32, #tpu.memory_space<vmem>>, vector<2x1x8x8xf32>
    %776 = vector.shape_cast %775 : vector<2x1x8x8xf32> to vector<2x8x8xf32>
    %777 = vector.shape_cast %774 : vector<2x8x8xf32> to vector<2x1x8x8xf32>
    tpu.vector_store %arg5[%c0_134, %c2_135, %c0_136, %c0_137], %777 {strides = array<i32>} : memref<2x4x8x8xf32, #tpu.memory_space<vmem>>, vector<2x1x8x8xf32>,
    %c3_138 = arith.constant 3 : index
    %778 = memref.load %arg4[%c3_138] : memref<4xf32, #tpu.memory_space<smem>>
    %779 = vector.broadcast %778 : f32 to vector<2x8x8xf32>
    %780 = arith.addf %759, %779 : vector<2x8x8xf32>
    %c0_139 = arith.constant 0 : index
    %c3_140 = arith.constant 3 : index
    %c0_141 = arith.constant 0 : index
    %c0_142 = arith.constant 0 : index
    %781 = vector.load %arg5[%c0_139, %c3_140, %c0_141, %c0_142] : memref<2x4x8x8xf32, #tpu.memory_space<vmem>>, vector<2x1x8x8xf32>
    %782 = vector.shape_cast %781 : vector<2x1x8x8xf32> to vector<2x8x8xf32>
    %783 = vector.shape_cast %780 : vector<2x8x8xf32> to vector<2x1x8x8xf32>
    tpu.vector_store %arg5[%c0_139, %c3_140, %c0_141, %c0_142], %783 {strides = array<i32>} : memref<2x4x8x8xf32, #tpu.memory_space<vmem>>, vector<2x1x8x8xf32>,
    return
  }
  func.func @transform_0(%arg0: i32) -> (i32, i32, i32, i32, i32, i32) {
    %c0_i32 = arith.constant 0 : i32
    %c0_i32_0 = arith.constant 0 : i32
    %c0_i32_1 = arith.constant 0 : i32
    %c0_i32_2 = arith.constant 0 : i32
    %c0_i32_3 = arith.constant 0 : i32
    %c0_i32_4 = arith.constant 0 : i32
    return %arg0, %c0_i32, %c0_i32_0, %c0_i32_1, %c0_i32_2, %c0_i32_3 : i32, i32, i32, i32, i32, i32
  }
  func.func @transform_1(%arg0: i32) -> i32 {
    %c0_i32 = arith.constant 0 : i32
    %c0_i32_0 = arith.constant 0 : i32
    return %c0_i32 : i32
  }
  func.func @transform_2(%arg0: i32) -> i32 {
    %c0_i32 = arith.constant 0 : i32
    %c0_i32_0 = arith.constant 0 : i32
    return %c0_i32 : i32
  }
  func.func @transform_3(%arg0: i32) -> i32 {
    %c0_i32 = arith.constant 0 : i32
    %c0_i32_0 = arith.constant 0 : i32
    return %c0_i32 : i32
  }
  func.func @transform_4(%arg0: i32) -> (i32, i32, i32, i32) {
    %c0_i32 = arith.constant 0 : i32
    %c0_i32_0 = arith.constant 0 : i32
    %c0_i32_1 = arith.constant 0 : i32
    %c0_i32_2 = arith.constant 0 : i32
    return %arg0, %c0_i32, %c0_i32_0, %c0_i32_1 : i32, i32, i32, i32
  }
}

</mosaic_0001>

<llo_original>
// kernel: downsample2d.1
$region0: #{downsample2d.1}
  #allocation0 [shape = 'u32[]', space=smem, size = 0x4, offset = 0x4, fixed_abs, tag = 'smem constant byte address 0x4 - core index']
  #allocation1 [shape = 'u32[144,128]{1,0:T(1,128)}', space=vmem, size = 0x12000, scoped, tag = 'internal scratch']
  %s0 = inlined_call_operand.vmem [shape: f32[2,2,2,4,9,9], index: 0, kind: input, shape index: {}]
  %s1 = inlined_call_operand.vmem [shape: f32[4], index: 1, kind: input, shape index: {}]
  %s2 = inlined_call_operand.vmem [shape: f32[144], index: 2, kind: input, shape index: {}]
  %s3 = inlined_call_operand.vmem [shape: f32[4], index: 3, kind: input, shape index: {}]
  %s4 = inlined_call_operand.hbm [shape: f32[2,4,8,8], index: 4, kind: output, shape index: {}]
  %s5 = sld [smem:[#allocation0]]
  $region38: #{downsample2d.1} parent=0
    _
  %s7 = ssub.s32 1, %s5
  %s8 = scalar_select 0, %s7, %s5
  $region1: #{downsample2d.1} parent=0
    #allocation2 [shape = 'u8[512]{0}', space=smem, size = 0x200, scoped, tag = 'input window, operand 1, single buffered']
    #allocation3 [shape = 's32[1]{0}', space=sflag, size = 0x4, scoped, tag = 'scoped memory for downsample2d.1']
    #allocation4 [shape = 's32[1]{0}', space=sflag, size = 0x4, scoped, tag = 'scoped memory for downsample2d.1']
    #allocation5 [shape = 'u8[1024]{0}', space=smem, size = 0x400, scoped, tag = 'input window, operand 2, single buffered']
    #allocation6 [shape = 's32[1]{0}', space=sflag, size = 0x4, scoped, tag = 'scoped memory for downsample2d.1']
    #allocation7 [shape = 'u8[512]{0}', space=smem, size = 0x200, scoped, tag = 'input window, operand 3, single buffered']
    #allocation8 [shape = 'u8[32768]{0}', space=vmem, size = 0x8000, scoped, tag = 'output window, operand 0, single buffered']
    %9 = vsyncpa [#allocation4], 0
    %10 = vsyncpa [#allocation6], 0
    %11 = vsyncpa [#allocation3], 0
    // Predicated region
    $region2: #{downsample2d.1} parent=1 // pred_check
      _
    $region3: #{downsample2d.1} parent=1 // pred_check_branch
      %13 = sbr.rel (0) target = $region5
    $region4: #{downsample2d.1} parent=1 // pred_region
      _
    $region5: #{downsample2d.1} parent=1 // pred_fallthru
      _
    // Predicated region
    $region6: #{downsample2d.1} parent=1 // pred_check
      _
    $region7: #{downsample2d.1} parent=1 // pred_check_branch
      %15 = sbr.rel (0) target = $region9
    $region8: #{downsample2d.1} parent=1 // pred_region
      %s17 = ssub.s32 16, 16
      %18 = vsyncadd [#allocation4], %s17
      %s20 = sshll.u32 %s1, 4
      %s21 = int_to_ptr.vmem [resolvable:$true] %s20
      %23 = dma.vmem_to_smem %s21, 16, [#allocation2], [#allocation4]
    $region9: #{downsample2d.1} parent=1 // pred_fallthru
      _
    // Predicated region
    $region10: #{downsample2d.1} parent=1 // pred_check
      _
    $region11: #{downsample2d.1} parent=1 // pred_check_branch
      %25 = sbr.rel (0) target = $region13
    $region12: #{downsample2d.1} parent=1 // pred_region
      %s27 = ssub.s32 32, 32
      %28 = vsyncadd [#allocation6], %s27
      %s30 = sshll.u32 %s2, 4
      %s31 = int_to_ptr.vmem [resolvable:$true] %s30
      %33 = dma.vmem_to_smem %s31, 32, [#allocation5], [#allocation6]
    $region13: #{downsample2d.1} parent=1 // pred_fallthru
      _
    // Predicated region
    $region14: #{downsample2d.1} parent=1 // pred_check
      _
    $region15: #{downsample2d.1} parent=1 // pred_check_branch
      %35 = sbr.rel (0) target = $region17
    $region16: #{downsample2d.1} parent=1 // pred_region
      %s37 = ssub.s32 16, 16
      %38 = vsyncadd [#allocation6], %s37
      %s40 = sshll.u32 %s3, 4
      %s41 = int_to_ptr.vmem [resolvable:$true] %s40
      %43 = dma.vmem_to_smem %s41, 16, [#allocation7], [#allocation6]
    $region17: #{downsample2d.1} parent=1 // pred_fallthru
      _
    // Predicated region
    $region18: #{downsample2d.1} parent=1 // pred_check
      _
    $region19: #{downsample2d.1} parent=1 // pred_check_branch
      %45 = sbr.rel (0) target = $region21
    $region20: #{downsample2d.1} parent=1 // pred_region
      %46 = dma.done [#allocation4], 16
    $region21: #{downsample2d.1} parent=1 // pred_fallthru
      _
    // Predicated region
    $region22: #{downsample2d.1} parent=1 // pred_check
      _
    $region23: #{downsample2d.1} parent=1 // pred_check_branch
      %48 = sbr.rel (0) target = $region25
    $region24: #{downsample2d.1} parent=1 // pred_region
      %49 = dma.done [#allocation6], 32
    $region25: #{downsample2d.1} parent=1 // pred_fallthru
      _
    // Predicated region
    $region26: #{downsample2d.1} parent=1 // pred_check
      _
    $region27: #{downsample2d.1} parent=1 // pred_check_branch
      %51 = sbr.rel (0) target = $region29
    $region28: #{downsample2d.1} parent=1 // pred_region
      %52 = dma.done [#allocation6], 16
    $region29: #{downsample2d.1} parent=1 // pred_fallthru
      _
    %53 = sfence
    %v54 = vld [vmem:[%s0] sm:$0xff]
    %v55 = vld [vmem:[%s0 + $0x8] sm:$0x1]
    %v56 = vld [vmem:[%s0 + $0x100] sm:$0xff]
    %v57 = vld [vmem:[%s0 + $0x108] sm:$0x1]
    %s58 = scalar_lea.vmem %s0, 16
    %v59 = vld [vmem:[%s58] sm:$0xff]
    %v60 = vld [vmem:[%s58 + $0x8] sm:$0x1]
    %v61 = vld [vmem:[%s58 + $0x100] sm:$0xff]
    %v62 = vld [vmem:[%s58 + $0x108] sm:$0x1]
    %s63 = scalar_lea.vmem %s0, 32
    %v64 = vld [vmem:[%s63] sm:$0xff]
    %v65 = vld [vmem:[%s63 + $0x8] sm:$0x1]
    %v66 = vld [vmem:[%s63 + $0x100] sm:$0xff]
    %v67 = vld [vmem:[%s63 + $0x108] sm:$0x1]
    %s68 = scalar_lea.vmem %s0, 48
    %v69 = vld [vmem:[%s68] sm:$0xff]
    %v70 = vld [vmem:[%s68 + $0x8] sm:$0x1]
    %v71 = vld [vmem:[%s68 + $0x100] sm:$0xff]
    %v72 = vld [vmem:[%s68 + $0x108] sm:$0x1]
    %v73 = vmul.f32 %v54, %v54
    %v74 = vmul.f32 %v55, %v55
    %v75 = vmul.f32 %v56, %v56
    %v76 = vmul.f32 %v57, %v57
    %v77 = vmul.f32 %v59, %v59
    %v78 = vmul.f32 %v60, %v60
    %v79 = vmul.f32 %v61, %v61
    %v80 = vmul.f32 %v62, %v62
    %v81 = vadd.f32 %v73, %v77
    %v82 = vadd.f32 %v74, %v78
    %v83 = vadd.f32 %v75, %v79
    %v84 = vadd.f32 %v76, %v80
    %v85 = vmul.f32 %v64, %v64
    %v86 = vmul.f32 %v65, %v65
    %v87 = vmul.f32 %v66, %v66
    %v88 = vmul.f32 %v67, %v67
    %v89 = vadd.f32 %v81, %v85
    %v90 = vadd.f32 %v82, %v86
    %v91 = vadd.f32 %v83, %v87
    %v92 = vadd.f32 %v84, %v88
    %v93 = vmul.f32 %v69, %v69
    %v94 = vmul.f32 %v70, %v70
    %v95 = vmul.f32 %v71, %v71
    %v96 = vmul.f32 %v72, %v72
    %v97 = vadd.f32 %v89, %v93
    %v98 = vadd.f32 %v90, %v94
    %v99 = vadd.f32 %v91, %v95
    %v100 = vadd.f32 %v92, %v96
    %v101 = vmul.f32 %v97, 0.25
    %v102 = vmul.f32 %v98, 0.25
    %v103 = vmul.f32 %v99, 0.25
    %v104 = vmul.f32 %v100, 0.25
    %v105 = vadd.f32 %v101, 1e-05
    %v106 = vadd.f32 %v102, 1e-05
    %v107 = vadd.f32 %v103, 1e-05
    %v108 = vadd.f32 %v104, 1e-05
    %v109 = vrsqrt.pop %v105
    %v110 = vrsqrt.pop %v106
    %v111 = vrsqrt.pop %v107
    %v112 = vrsqrt.pop %v108
    %v113 = vmul.f32 %v54, %v109
    %v114 = vmul.f32 %v55, %v110
    %v115 = vmul.f32 %v56, %v111
    %v116 = vmul.f32 %v57, %v112
    %s117 = sld [smem:[#allocation2]]
    %v118 = vstv %s117
    %v119 = vmul.f32 %v113, %v118
    %v120 = vmul.f32 %v114, %v118
    %v121 = vmul.f32 %v115, %v118
    %v122 = vmul.f32 %v116, %v118
    %v123 = vmul.f32 %v59, %v109
    %v124 = vmul.f32 %v60, %v110
    %v125 = vmul.f32 %v61, %v111
    %v126 = vmul.f32 %v62, %v112
    %s127 = sld [smem:[#allocation2 + $0x1]]
    %v128 = vstv %s127
    %v129 = vmul.f32 %v123, %v128
    %v130 = vmul.f32 %v124, %v128
    %v131 = vmul.f32 %v125, %v128
    %v132 = vmul.f32 %v126, %v128
    %v133 = vmul.f32 %v64, %v109
    %v134 = vmul.f32 %v65, %v110
    %v135 = vmul.f32 %v66, %v111
    %v136 = vmul.f32 %v67, %v112
    %s137 = sld [smem:[#allocation2 + $0x2]]
    %v138 = vstv %s137
    %v139 = vmul.f32 %v133, %v138
    %v140 = vmul.f32 %v134, %v138
    %v141 = vmul.f32 %v135, %v138
    %v142 = vmul.f32 %v136, %v138
    %v143 = vmul.f32 %v69, %v109
    %v144 = vmul.f32 %v70, %v110
    %v145 = vmul.f32 %v71, %v111
    %v146 = vmul.f32 %v72, %v112
    %s147 = sld [smem:[#allocation2 + $0x3]]
    %v148 = vstv %s147
    %v149 = vmul.f32 %v143, %v148
    %v150 = vmul.f32 %v144, %v148
    %v151 = vmul.f32 %v145, %v148
    %v152 = vmul.f32 %v146, %v148
    %s153 = sld [smem:[#allocation5]]
    %v154 = vstv %s153
    %v155 = vmul.f32 %v119, %v154
    %v156 = vmul.f32 %v121, %v154
    %v157 = vadd.f32 %v155, 0.0
    %v158 = vadd.f32 %v156, 0.0
    %s159 = sld [smem:[#allocation5 + $0x1]]
    %v160 = vstv %s159
    %v161 = vmul.f32 %v119, %v160
    %v162 = vmul.f32 %v121, %v160
    %v163 = vadd.f32 %v161, 0.0
    %v164 = vadd.f32 %v162, 0.0
    %s165 = sld [smem:[#allocation5 + $0x2]]
    %v166 = vstv %s165
    %v167 = vmul.f32 %v119, %v166
    %v168 = vmul.f32 %v121, %v166
    %v169 = vadd.f32 %v167, 0.0
    %v170 = vadd.f32 %v168, 0.0
    %s171 = sld [smem:[#allocation5 + $0x3]]
    %v172 = vstv %s171
    %v173 = vmul.f32 %v119, %v172
    %v174 = vmul.f32 %v121, %v172
    %v175 = vadd.f32 %v173, 0.0
    %v176 = vadd.f32 %v174, 0.0
    %s177 = sld [smem:[#allocation5 + $0x20]]
    %v178 = vstv %s177
    %v179 = vmul.f32 %v119, %v178
    %v180 = vmul.f32 %v121, %v178
    %183 = vrot.lane.b32.xlu0 %v179, 127
    %v184 = vpop.permute.xlu0 %183
    %185 = vrot.lane.b32.xlu0 %v180, 127
    %v186 = vpop.permute.xlu0 %185
    %v189 = vadd.f32 %v157, %v184
    %v190 = vadd.f32 %v158, %v186
    %s191 = sld [smem:[#allocation5 + $0x21]]
    %v192 = vstv %s191
    %v193 = vmul.f32 %v119, %v192
    %v194 = vmul.f32 %v121, %v192
    %197 = vrot.lane.b32.xlu0 %v193, 127
    %v198 = vpop.permute.xlu0 %197
    %199 = vrot.lane.b32.xlu0 %v194, 127
    %v200 = vpop.permute.xlu0 %199
    %v203 = vadd.f32 %v163, %v198
    %v204 = vadd.f32 %v164, %v200
    %s205 = sld [smem:[#allocation5 + $0x22]]
    %v206 = vstv %s205
    %v207 = vmul.f32 %v119, %v206
    %v208 = vmul.f32 %v121, %v206
    %211 = vrot.lane.b32.xlu0 %v207, 127
    %v212 = vpop.permute.xlu0 %211
    %213 = vrot.lane.b32.xlu0 %v208, 127
    %v214 = vpop.permute.xlu0 %213
    %v217 = vadd.f32 %v169, %v212
    %v218 = vadd.f32 %v170, %v214
    %s219 = sld [smem:[#allocation5 + $0x23]]
    %v220 = vstv %s219
    %v221 = vmul.f32 %v119, %v220
    %v222 = vmul.f32 %v121, %v220
    %225 = vrot.lane.b32.xlu0 %v221, 127
    %v226 = vpop.permute.xlu0 %225
    %227 = vrot.lane.b32.xlu0 %v222, 127
    %v228 = vpop.permute.xlu0 %227
    %v231 = vadd.f32 %v175, %v226
    %v232 = vadd.f32 %v176, %v228
    %s233 = sld [smem:[#allocation5 + $0x60]]
    %v234 = vstv %s233
    %v235 = vmul.f32 %v119, %v234
    %v236 = vmul.f32 %v120, %v234
    %v237 = vmul.f32 %v121, %v234
    %v238 = vmul.f32 %v122, %v234
    %vm243 = vcmask 1046528
    %v244 = vrot.slane %v235, 1
    %v245 = vrot.slane %v236, 1
    %v246 = vsel %vm243, %v244, %v245
    %v247 = vrot.slane %v237, 1
    %v248 = vrot.slane %v238, 1
    %v249 = vsel %vm243, %v247, %v248
    %v252 = vadd.f32 %v189, %v246
    %v253 = vadd.f32 %v190, %v249
    %s254 = sld [smem:[#allocation5 + $0x61]]
    %v255 = vstv %s254
    %v256 = vmul.f32 %v119, %v255
    %v257 = vmul.f32 %v120, %v255
    %v258 = vmul.f32 %v121, %v255
    %v259 = vmul.f32 %v122, %v255
    %v264 = vrot.slane %v256, 1
    %v265 = vrot.slane %v257, 1
    %v266 = vsel %vm243, %v264, %v265
    %v267 = vrot.slane %v258, 1
    %v268 = vrot.slane %v259, 1
    %v269 = vsel %vm243, %v267, %v268
    %v272 = vadd.f32 %v203, %v266
    %v273 = vadd.f32 %v204, %v269
    %s274 = sld [smem:[#allocation5 + $0x62]]
    %v275 = vstv %s274
    %v276 = vmul.f32 %v119, %v275
    %v277 = vmul.f32 %v120, %v275
    %v278 = vmul.f32 %v121, %v275
    %v279 = vmul.f32 %v122, %v275
    %v284 = vrot.slane %v276, 1
    %v285 = vrot.slane %v277, 1
    %v286 = vsel %vm243, %v284, %v285
    %v287 = vrot.slane %v278, 1
    %v288 = vrot.slane %v279, 1
    %v289 = vsel %vm243, %v287, %v288
    %v292 = vadd.f32 %v217, %v286
    %v293 = vadd.f32 %v218, %v289
    %s294 = sld [smem:[#allocation5 + $0x63]]
    %v295 = vstv %s294
    %v296 = vmul.f32 %v119, %v295
    %v297 = vmul.f32 %v120, %v295
    %v298 = vmul.f32 %v121, %v295
    %v299 = vmul.f32 %v122, %v295
    %v304 = vrot.slane %v296, 1
    %v305 = vrot.slane %v297, 1
    %v306 = vsel %vm243, %v304, %v305
    %v307 = vrot.slane %v298, 1
    %v308 = vrot.slane %v299, 1
    %v309 = vsel %vm243, %v307, %v308
    %v312 = vadd.f32 %v231, %v306
    %v313 = vadd.f32 %v232, %v309
    %s314 = sld [smem:[#allocation5 + $0x80]]
    %v315 = vstv %s314
    %v316 = vmul.f32 %v119, %v315
    %v317 = vmul.f32 %v120, %v315
    %v318 = vmul.f32 %v121, %v315
    %v319 = vmul.f32 %v122, %v315
    %v324 = vrot.slane %v316, 1
    %v325 = vrot.slane %v317, 1
    %v326 = vsel %vm243, %v324, %v325
    %v327 = vrot.slane %v318, 1
    %v328 = vrot.slane %v319, 1
    %v329 = vsel %vm243, %v327, %v328
    %330 = vrot.lane.b32.xlu0 %v326, 127
    %v331 = vpop.permute.xlu0 %330
    %332 = vrot.lane.b32.xlu0 %v329, 127
    %v333 = vpop.permute.xlu0 %332
    %v336 = vadd.f32 %v252, %v331
    %v337 = vadd.f32 %v253, %v333
    %s338 = sld [smem:[#allocation5 + $0x81]]
    %v339 = vstv %s338
    %v340 = vmul.f32 %v119, %v339
    %v341 = vmul.f32 %v120, %v339
    %v342 = vmul.f32 %v121, %v339
    %v343 = vmul.f32 %v122, %v339
    %v348 = vrot.slane %v340, 1
    %v349 = vrot.slane %v341, 1
    %v350 = vsel %vm243, %v348, %v349
    %v351 = vrot.slane %v342, 1
    %v352 = vrot.slane %v343, 1
    %v353 = vsel %vm243, %v351, %v352
    %354 = vrot.lane.b32.xlu0 %v350, 127
    %v355 = vpop.permute.xlu0 %354
    %356 = vrot.lane.b32.xlu0 %v353, 127
    %v357 = vpop.permute.xlu0 %356
    %v360 = vadd.f32 %v272, %v355
    %v361 = vadd.f32 %v273, %v357
    %s362 = sld [smem:[#allocation5 + $0x82]]
    %v363 = vstv %s362
    %v364 = vmul.f32 %v119, %v363
    %v365 = vmul.f32 %v120, %v363
    %v366 = vmul.f32 %v121, %v363
    %v367 = vmul.f32 %v122, %v363
    %v372 = vrot.slane %v364, 1
    %v373 = vrot.slane %v365, 1
    %v374 = vsel %vm243, %v372, %v373
    %v375 = vrot.slane %v366, 1
    %v376 = vrot.slane %v367, 1
    %v377 = vsel %vm243, %v375, %v376
    %378 = vrot.lane.b32.xlu0 %v374, 127
    %v379 = vpop.permute.xlu0 %378
    %380 = vrot.lane.b32.xlu0 %v377, 127
    %v381 = vpop.permute.xlu0 %380
    %v384 = vadd.f32 %v292, %v379
    %v385 = vadd.f32 %v293, %v381
    %s386 = sld [smem:[#allocation5 + $0x83]]
    %v387 = vstv %s386
    %v388 = vmul.f32 %v119, %v387
    %v389 = vmul.f32 %v120, %v387
    %v390 = vmul.f32 %v121, %v387
    %v391 = vmul.f32 %v122, %v387
    %v396 = vrot.slane %v388, 1
    %v397 = vrot.slane %v389, 1
    %v398 = vsel %vm243, %v396, %v397
    %v399 = vrot.slane %v390, 1
    %v400 = vrot.slane %v391, 1
    %v401 = vsel %vm243, %v399, %v400
    %402 = vrot.lane.b32.xlu0 %v398, 127
    %v403 = vpop.permute.xlu0 %402
    %404 = vrot.lane.b32.xlu0 %v401, 127
    %v405 = vpop.permute.xlu0 %404
    %v408 = vadd.f32 %v312, %v403
    %v409 = vadd.f32 %v313, %v405
    %s410 = sld [smem:[#allocation5 + $0x4]]
    %v411 = vstv %s410
    %v412 = vmul.f32 %v129, %v411
    %v413 = vmul.f32 %v131, %v411
    %v414 = vadd.f32 %v336, %v412
    %v415 = vadd.f32 %v337, %v413
    %s416 = sld [smem:[#allocation5 + $0x5]]
    %v417 = vstv %s416
    %v418 = vmul.f32 %v129, %v417
    %v419 = vmul.f32 %v131, %v417
    %v420 = vadd.f32 %v360, %v418
    %v421 = vadd.f32 %v361, %v419
    %s422 = sld [smem:[#allocation5 + $0x6]]
    %v423 = vstv %s422
    %v424 = vmul.f32 %v129, %v423
    %v425 = vmul.f32 %v131, %v423
    %v426 = vadd.f32 %v384, %v424
    %v427 = vadd.f32 %v385, %v425
    %s428 = sld [smem:[#allocation5 + $0x7]]
    %v429 = vstv %s428
    %v430 = vmul.f32 %v129, %v429
    %v431 = vmul.f32 %v131, %v429
    %v432 = vadd.f32 %v408, %v430
    %v433 = vadd.f32 %v409, %v431
    %s434 = sld [smem:[#allocation5 + $0x24]]
    %v435 = vstv %s434
    %v436 = vmul.f32 %v129, %v435
    %v437 = vmul.f32 %v131, %v435
    %440 = vrot.lane.b32.xlu0 %v436, 127
    %v441 = vpop.permute.xlu0 %440
    %442 = vrot.lane.b32.xlu0 %v437, 127
    %v443 = vpop.permute.xlu0 %442
    %v446 = vadd.f32 %v414, %v441
    %v447 = vadd.f32 %v415, %v443
    %s448 = sld [smem:[#allocation5 + $0x25]]
    %v449 = vstv %s448
    %v450 = vmul.f32 %v129, %v449
    %v451 = vmul.f32 %v131, %v449
    %454 = vrot.lane.b32.xlu0 %v450, 127
    %v455 = vpop.permute.xlu0 %454
    %456 = vrot.lane.b32.xlu0 %v451, 127
    %v457 = vpop.permute.xlu0 %456
    %v460 = vadd.f32 %v420, %v455
    %v461 = vadd.f32 %v421, %v457
    %s462 = sld [smem:[#allocation5 + $0x26]]
    %v463 = vstv %s462
    %v464 = vmul.f32 %v129, %v463
    %v465 = vmul.f32 %v131, %v463
    %468 = vrot.lane.b32.xlu0 %v464, 127
    %v469 = vpop.permute.xlu0 %468
    %470 = vrot.lane.b32.xlu0 %v465, 127
    %v471 = vpop.permute.xlu0 %470
    %v474 = vadd.f32 %v426, %v469
    %v475 = vadd.f32 %v427, %v471
    %s476 = sld [smem:[#allocation5 + $0x27]]
    %v477 = vstv %s476
    %v478 = vmul.f32 %v129, %v477
    %v479 = vmul.f32 %v131, %v477
    %482 = vrot.lane.b32.xlu0 %v478, 127
    %v483 = vpop.permute.xlu0 %482
    %484 = vrot.lane.b32.xlu0 %v479, 127
    %v485 = vpop.permute.xlu0 %484
    %v488 = vadd.f32 %v432, %v483
    %v489 = vadd.f32 %v433, %v485
    %s490 = sld [smem:[#allocation5 + $0x64]]
    %v491 = vstv %s490
    %v492 = vmul.f32 %v129, %v491
    %v493 = vmul.f32 %v130, %v491
    %v494 = vmul.f32 %v131, %v491
    %v495 = vmul.f32 %v132, %v491
    %v500 = vrot.slane %v492, 1
    %v501 = vrot.slane %v493, 1
    %v502 = vsel %vm243, %v500, %v501
    %v503 = vrot.slane %v494, 1
    %v504 = vrot.slane %v495, 1
    %v505 = vsel %vm243, %v503, %v504
    %v508 = vadd.f32 %v446, %v502
    %v509 = vadd.f32 %v447, %v505
    %s510 = sld [smem:[#allocation5 + $0x65]]
    %v511 = vstv %s510
    %v512 = vmul.f32 %v129, %v511
    %v513 = vmul.f32 %v130, %v511
    %v514 = vmul.f32 %v131, %v511
    %v515 = vmul.f32 %v132, %v511
    %v520 = vrot.slane %v512, 1
    %v521 = vrot.slane %v513, 1
    %v522 = vsel %vm243, %v520, %v521
    %v523 = vrot.slane %v514, 1
    %v524 = vrot.slane %v515, 1
    %v525 = vsel %vm243, %v523, %v524
    %v528 = vadd.f32 %v460, %v522
    %v529 = vadd.f32 %v461, %v525
    %s530 = sld [smem:[#allocation5 + $0x66]]
    %v531 = vstv %s530
    %v532 = vmul.f32 %v129, %v531
    %v533 = vmul.f32 %v130, %v531
    %v534 = vmul.f32 %v131, %v531
    %v535 = vmul.f32 %v132, %v531
    %v540 = vrot.slane %v532, 1
    %v541 = vrot.slane %v533, 1
    %v542 = vsel %vm243, %v540, %v541
    %v543 = vrot.slane %v534, 1
    %v544 = vrot.slane %v535, 1
    %v545 = vsel %vm243, %v543, %v544
    %v548 = vadd.f32 %v474, %v542
    %v549 = vadd.f32 %v475, %v545
    %s550 = sld [smem:[#allocation5 + $0x67]]
    %v551 = vstv %s550
    %v552 = vmul.f32 %v129, %v551
    %v553 = vmul.f32 %v130, %v551
    %v554 = vmul.f32 %v131, %v551
    %v555 = vmul.f32 %v132, %v551
    %v560 = vrot.slane %v552, 1
    %v561 = vrot.slane %v553, 1
    %v562 = vsel %vm243, %v560, %v561
    %v563 = vrot.slane %v554, 1
    %v564 = vrot.slane %v555, 1
    %v565 = vsel %vm243, %v563, %v564
    %v568 = vadd.f32 %v488, %v562
    %v569 = vadd.f32 %v489, %v565
    %s570 = sld [smem:[#allocation5 + $0x84]]
    %v571 = vstv %s570
    %v572 = vmul.f32 %v129, %v571
    %v573 = vmul.f32 %v130, %v571
    %v574 = vmul.f32 %v131, %v571
    %v575 = vmul.f32 %v132, %v571
    %v580 = vrot.slane %v572, 1
    %v581 = vrot.slane %v573, 1
    %v582 = vsel %vm243, %v580, %v581
    %v583 = vrot.slane %v574, 1
    %v584 = vrot.slane %v575, 1
    %v585 = vsel %vm243, %v583, %v584
    %586 = vrot.lane.b32.xlu0 %v582, 127
    %v587 = vpop.permute.xlu0 %586
    %588 = vrot.lane.b32.xlu0 %v585, 127
    %v589 = vpop.permute.xlu0 %588
    %v592 = vadd.f32 %v508, %v587
    %v593 = vadd.f32 %v509, %v589
    %s594 = sld [smem:[#allocation5 + $0x85]]
    %v595 = vstv %s594
    %v596 = vmul.f32 %v129, %v595
    %v597 = vmul.f32 %v130, %v595
    %v598 = vmul.f32 %v131, %v595
    %v599 = vmul.f32 %v132, %v595
    %v604 = vrot.slane %v596, 1
    %v605 = vrot.slane %v597, 1
    %v606 = vsel %vm243, %v604, %v605
    %v607 = vrot.slane %v598, 1
    %v608 = vrot.slane %v599, 1
    %v609 = vsel %vm243, %v607, %v608
    %610 = vrot.lane.b32.xlu0 %v606, 127
    %v611 = vpop.permute.xlu0 %610
    %612 = vrot.lane.b32.xlu0 %v609, 127
    %v613 = vpop.permute.xlu0 %612
    %v616 = vadd.f32 %v528, %v611
    %v617 = vadd.f32 %v529, %v613
    %s618 = sld [smem:[#allocation5 + $0x86]]
    %v619 = vstv %s618
    %v620 = vmul.f32 %v129, %v619
    %v621 = vmul.f32 %v130, %v619
    %v622 = vmul.f32 %v131, %v619
    %v623 = vmul.f32 %v132, %v619
    %v628 = vrot.slane %v620, 1
    %v629 = vrot.slane %v621, 1
    %v630 = vsel %vm243, %v628, %v629
    %v631 = vrot.slane %v622, 1
    %v632 = vrot.slane %v623, 1
    %v633 = vsel %vm243, %v631, %v632
    %634 = vrot.lane.b32.xlu0 %v630, 127
    %v635 = vpop.permute.xlu0 %634
    %636 = vrot.lane.b32.xlu0 %v633, 127
    %v637 = vpop.permute.xlu0 %636
    %v640 = vadd.f32 %v548, %v635
    %v641 = vadd.f32 %v549, %v637
    %s642 = sld [smem:[#allocation5 + $0x87]]
    %v643 = vstv %s642
    %v644 = vmul.f32 %v129, %v643
    %v645 = vmul.f32 %v130, %v643
    %v646 = vmul.f32 %v131, %v643
    %v647 = vmul.f32 %v132, %v643
    %v652 = vrot.slane %v644, 1
    %v653 = vrot.slane %v645, 1
    %v654 = vsel %vm243, %v652, %v653
    %v655 = vrot.slane %v646, 1
    %v656 = vrot.slane %v647, 1
    %v657 = vsel %vm243, %v655, %v656
    %658 = vrot.lane.b32.xlu0 %v654, 127
    %v659 = vpop.permute.xlu0 %658
    %660 = vrot.lane.b32.xlu0 %v657, 127
    %v661 = vpop.permute.xlu0 %660
    %v664 = vadd.f32 %v568, %v659
    %v665 = vadd.f32 %v569, %v661
    %s666 = sld [smem:[#allocation5 + $0x8]]
    %v667 = vstv %s666
    %v668 = vmul.f32 %v139, %v667
    %v669 = vmul.f32 %v141, %v667
    %v670 = vadd.f32 %v592, %v668
    %v671 = vadd.f32 %v593, %v669
    %s672 = sld [smem:[#allocation5 + $0x9]]
    %v673 = vstv %s672
    %v674 = vmul.f32 %v139, %v673
    %v675 = vmul.f32 %v141, %v673
    %v676 = vadd.f32 %v616, %v674
    %v677 = vadd.f32 %v617, %v675
    %s678 = sld [smem:[#allocation5 + $0xa]]
    %v679 = vstv %s678
    %v680 = vmul.f32 %v139, %v679
    %v681 = vmul.f32 %v141, %v679
    %v682 = vadd.f32 %v640, %v680
    %v683 = vadd.f32 %v641, %v681
    %s684 = sld [smem:[#allocation5 + $0xb]]
    %v685 = vstv %s684
    %v686 = vmul.f32 %v139, %v685
    %v687 = vmul.f32 %v141, %v685
    %v688 = vadd.f32 %v664, %v686
    %v689 = vadd.f32 %v665, %v687
    %s690 = sld [smem:[#allocation5 + $0x28]]
    %v691 = vstv %s690
    %v692 = vmul.f32 %v139, %v691
    %v693 = vmul.f32 %v141, %v691
    %696 = vrot.lane.b32.xlu0 %v692, 127
    %v697 = vpop.permute.xlu0 %696
    %698 = vrot.lane.b32.xlu0 %v693, 127
    %v699 = vpop.permute.xlu0 %698
    %v702 = vadd.f32 %v670, %v697
    %v703 = vadd.f32 %v671, %v699
    %s704 = sld [smem:[#allocation5 + $0x29]]
    %v705 = vstv %s704
    %v706 = vmul.f32 %v139, %v705
    %v707 = vmul.f32 %v141, %v705
    %710 = vrot.lane.b32.xlu0 %v706, 127
    %v711 = vpop.permute.xlu0 %710
    %712 = vrot.lane.b32.xlu0 %v707, 127
    %v713 = vpop.permute.xlu0 %712
    %v716 = vadd.f32 %v676, %v711
    %v717 = vadd.f32 %v677, %v713
    %s718 = sld [smem:[#allocation5 + $0x2a]]
    %v719 = vstv %s718
    %v720 = vmul.f32 %v139, %v719
    %v721 = vmul.f32 %v141, %v719
    %724 = vrot.lane.b32.xlu0 %v720, 127
    %v725 = vpop.permute.xlu0 %724
    %726 = vrot.lane.b32.xlu0 %v721, 127
    %v727 = vpop.permute.xlu0 %726
    %v730 = vadd.f32 %v682, %v725
    %v731 = vadd.f32 %v683, %v727
    %s732 = sld [smem:[#allocation5 + $0x2b]]
    %v733 = vstv %s732
    %v734 = vmul.f32 %v139, %v733
    %v735 = vmul.f32 %v141, %v733
    %738 = vrot.lane.b32.xlu0 %v734, 127
    %v739 = vpop.permute.xlu0 %738
    %740 = vrot.lane.b32.xlu0 %v735, 127
    %v741 = vpop.permute.xlu0 %740
    %v744 = vadd.f32 %v688, %v739
    %v745 = vadd.f32 %v689, %v741
    %s746 = sld [smem:[#allocation5 + $0x68]]
    %v747 = vstv %s746
    %v748 = vmul.f32 %v139, %v747
    %v749 = vmul.f32 %v140, %v747
    %v750 = vmul.f32 %v141, %v747
    %v751 = vmul.f32 %v142, %v747
    %v756 = vrot.slane %v748, 1
    %v757 = vrot.slane %v749, 1
    %v758 = vsel %vm243, %v756, %v757
    %v759 = vrot.slane %v750, 1
    %v760 = vrot.slane %v751, 1
    %v761 = vsel %vm243, %v759, %v760
    %v764 = vadd.f32 %v702, %v758
    %v765 = vadd.f32 %v703, %v761
    %s766 = sld [smem:[#allocation5 + $0x69]]
    %v767 = vstv %s766
    %v768 = vmul.f32 %v139, %v767
    %v769 = vmul.f32 %v140, %v767
    %v770 = vmul.f32 %v141, %v767
    %v771 = vmul.f32 %v142, %v767
    %v776 = vrot.slane %v768, 1
    %v777 = vrot.slane %v769, 1
    %v778 = vsel %vm243, %v776, %v777
    %v779 = vrot.slane %v770, 1
    %v780 = vrot.slane %v771, 1
    %v781 = vsel %vm243, %v779, %v780
    %v784 = vadd.f32 %v716, %v778
    %v785 = vadd.f32 %v717, %v781
    %s786 = sld [smem:[#allocation5 + $0x6a]]
    %v787 = vstv %s786
    %v788 = vmul.f32 %v139, %v787
    %v789 = vmul.f32 %v140, %v787
    %v790 = vmul.f32 %v141, %v787
    %v791 = vmul.f32 %v142, %v787
    %v796 = vrot.slane %v788, 1
    %v797 = vrot.slane %v789, 1
    %v798 = vsel %vm243, %v796, %v797
    %v799 = vrot.slane %v790, 1
    %v800 = vrot.slane %v791, 1
    %v801 = vsel %vm243, %v799, %v800
    %v804 = vadd.f32 %v730, %v798
    %v805 = vadd.f32 %v731, %v801
    %s806 = sld [smem:[#allocation5 + $0x6b]]
    %v807 = vstv %s806
    %v808 = vmul.f32 %v139, %v807
    %v809 = vmul.f32 %v140, %v807
    %v810 = vmul.f32 %v141, %v807
    %v811 = vmul.f32 %v142, %v807
    %v816 = vrot.slane %v808, 1
    %v817 = vrot.slane %v809, 1
    %v818 = vsel %vm243, %v816, %v817
    %v819 = vrot.slane %v810, 1
    %v820 = vrot.slane %v811, 1
    %v821 = vsel %vm243, %v819, %v820
    %v824 = vadd.f32 %v744, %v818
    %v825 = vadd.f32 %v745, %v821
    %s826 = sld [smem:[#allocation5 + $0x88]]
    %v827 = vstv %s826
    %v828 = vmul.f32 %v139, %v827
    %v829 = vmul.f32 %v140, %v827
    %v830 = vmul.f32 %v141, %v827
    %v831 = vmul.f32 %v142, %v827
    %v836 = vrot.slane %v828, 1
    %v837 = vrot.slane %v829, 1
    %v838 = vsel %vm243, %v836, %v837
    %v839 = vrot.slane %v830, 1
    %v840 = vrot.slane %v831, 1
    %v841 = vsel %vm243, %v839, %v840
    %842 = vrot.lane.b32.xlu0 %v838, 127
    %v843 = vpop.permute.xlu0 %842
    %844 = vrot.lane.b32.xlu0 %v841, 127
    %v845 = vpop.permute.xlu0 %844
    %v848 = vadd.f32 %v764, %v843
    %v849 = vadd.f32 %v765, %v845
    %s850 = sld [smem:[#allocation5 + $0x89]]
    %v851 = vstv %s850
    %v852 = vmul.f32 %v139, %v851
    %v853 = vmul.f32 %v140, %v851
    %v854 = vmul.f32 %v141, %v851
    %v855 = vmul.f32 %v142, %v851
    %v860 = vrot.slane %v852, 1
    %v861 = vrot.slane %v853, 1
    %v862 = vsel %vm243, %v860, %v861
    %v863 = vrot.slane %v854, 1
    %v864 = vrot.slane %v855, 1
    %v865 = vsel %vm243, %v863, %v864
    %866 = vrot.lane.b32.xlu0 %v862, 127
    %v867 = vpop.permute.xlu0 %866
    %868 = vrot.lane.b32.xlu0 %v865, 127
    %v869 = vpop.permute.xlu0 %868
    %v872 = vadd.f32 %v784, %v867
    %v873 = vadd.f32 %v785, %v869
    %s874 = sld [smem:[#allocation5 + $0x8a]]
    %v875 = vstv %s874
    %v876 = vmul.f32 %v139, %v875
    %v877 = vmul.f32 %v140, %v875
    %v878 = vmul.f32 %v141, %v875
    %v879 = vmul.f32 %v142, %v875
    %v884 = vrot.slane %v876, 1
    %v885 = vrot.slane %v877, 1
    %v886 = vsel %vm243, %v884, %v885
    %v887 = vrot.slane %v878, 1
    %v888 = vrot.slane %v879, 1
    %v889 = vsel %vm243, %v887, %v888
    %890 = vrot.lane.b32.xlu0 %v886, 127
    %v891 = vpop.permute.xlu0 %890
    %892 = vrot.lane.b32.xlu0 %v889, 127
    %v893 = vpop.permute.xlu0 %892
    %v896 = vadd.f32 %v804, %v891
    %v897 = vadd.f32 %v805, %v893
    %s898 = sld [smem:[#allocation5 + $0x8b]]
    %v899 = vstv %s898
    %v900 = vmul.f32 %v139, %v899
    %v901 = vmul.f32 %v140, %v899
    %v902 = vmul.f32 %v141, %v899
    %v903 = vmul.f32 %v142, %v899
    %v908 = vrot.slane %v900, 1
    %v909 = vrot.slane %v901, 1
    %v910 = vsel %vm243, %v908, %v909
    %v911 = vrot.slane %v902, 1
    %v912 = vrot.slane %v903, 1
    %v913 = vsel %vm243, %v911, %v912
    %914 = vrot.lane.b32.xlu0 %v910, 127
    %v915 = vpop.permute.xlu0 %914
    %916 = vrot.lane.b32.xlu0 %v913, 127
    %v917 = vpop.permute.xlu0 %916
    %v920 = vadd.f32 %v824, %v915
    %v921 = vadd.f32 %v825, %v917
    %s922 = sld [smem:[#allocation5 + $0xc]]
    %v923 = vstv %s922
    %v924 = vmul.f32 %v149, %v923
    %v925 = vmul.f32 %v151, %v923
    %v926 = vadd.f32 %v848, %v924
    %v927 = vadd.f32 %v849, %v925
    %s928 = sld [smem:[#allocation5 + $0xd]]
    %v929 = vstv %s928
    %v930 = vmul.f32 %v149, %v929
    %v931 = vmul.f32 %v151, %v929
    %v932 = vadd.f32 %v872, %v930
    %v933 = vadd.f32 %v873, %v931
    %s934 = sld [smem:[#allocation5 + $0xe]]
    %v935 = vstv %s934
    %v936 = vmul.f32 %v149, %v935
    %v937 = vmul.f32 %v151, %v935
    %v938 = vadd.f32 %v896, %v936
    %v939 = vadd.f32 %v897, %v937
    %s940 = sld [smem:[#allocation5 + $0xf]]
    %v941 = vstv %s940
    %v942 = vmul.f32 %v149, %v941
    %v943 = vmul.f32 %v151, %v941
    %v944 = vadd.f32 %v920, %v942
    %v945 = vadd.f32 %v921, %v943
    %s946 = sld [smem:[#allocation5 + $0x2c]]
    %v947 = vstv %s946
    %v948 = vmul.f32 %v149, %v947
    %v949 = vmul.f32 %v151, %v947
    %952 = vrot.lane.b32.xlu0 %v948, 127
    %v953 = vpop.permute.xlu0 %952
    %954 = vrot.lane.b32.xlu0 %v949, 127
    %v955 = vpop.permute.xlu0 %954
    %v958 = vadd.f32 %v926, %v953
    %v959 = vadd.f32 %v927, %v955
    %s960 = sld [smem:[#allocation5 + $0x2d]]
    %v961 = vstv %s960
    %v962 = vmul.f32 %v149, %v961
    %v963 = vmul.f32 %v151, %v961
    %966 = vrot.lane.b32.xlu0 %v962, 127
    %v967 = vpop.permute.xlu0 %966
    %968 = vrot.lane.b32.xlu0 %v963, 127
    %v969 = vpop.permute.xlu0 %968
    %v972 = vadd.f32 %v932, %v967
    %v973 = vadd.f32 %v933, %v969
    %s974 = sld [smem:[#allocation5 + $0x2e]]
    %v975 = vstv %s974
    %v976 = vmul.f32 %v149, %v975
    %v977 = vmul.f32 %v151, %v975
    %980 = vrot.lane.b32.xlu0 %v976, 127
    %v981 = vpop.permute.xlu0 %980
    %982 = vrot.lane.b32.xlu0 %v977, 127
    %v983 = vpop.permute.xlu0 %982
    %v986 = vadd.f32 %v938, %v981
    %v987 = vadd.f32 %v939, %v983
    %s988 = sld [smem:[#allocation5 + $0x2f]]
    %v989 = vstv %s988
    %v990 = vmul.f32 %v149, %v989
    %v991 = vmul.f32 %v151, %v989
    %994 = vrot.lane.b32.xlu0 %v990, 127
    %v995 = vpop.permute.xlu0 %994
    %996 = vrot.lane.b32.xlu0 %v991, 127
    %v997 = vpop.permute.xlu0 %996
    %v1000 = vadd.f32 %v944, %v995
    %v1001 = vadd.f32 %v945, %v997
    %s1002 = sld [smem:[#allocation5 + $0x6c]]
    %v1003 = vstv %s1002
    %v1004 = vmul.f32 %v149, %v1003
    %v1005 = vmul.f32 %v150, %v1003
    %v1006 = vmul.f32 %v151, %v1003
    %v1007 = vmul.f32 %v152, %v1003
    %v1012 = vrot.slane %v1004, 1
    %v1013 = vrot.slane %v1005, 1
    %v1014 = vsel %vm243, %v1012, %v1013
    %v1015 = vrot.slane %v1006, 1
    %v1016 = vrot.slane %v1007, 1
    %v1017 = vsel %vm243, %v1015, %v1016
    %v1020 = vadd.f32 %v958, %v1014
    %v1021 = vadd.f32 %v959, %v1017
    %s1022 = sld [smem:[#allocation5 + $0x6d]]
    %v1023 = vstv %s1022
    %v1024 = vmul.f32 %v149, %v1023
    %v1025 = vmul.f32 %v150, %v1023
    %v1026 = vmul.f32 %v151, %v1023
    %v1027 = vmul.f32 %v152, %v1023
    %v1032 = vrot.slane %v1024, 1
    %v1033 = vrot.slane %v1025, 1
    %v1034 = vsel %vm243, %v1032, %v1033
    %v1035 = vrot.slane %v1026, 1
    %v1036 = vrot.slane %v1027, 1
    %v1037 = vsel %vm243, %v1035, %v1036
    %v1040 = vadd.f32 %v972, %v1034
    %v1041 = vadd.f32 %v973, %v1037
    %s1042 = sld [smem:[#allocation5 + $0x6e]]
    %v1043 = vstv %s1042
    %v1044 = vmul.f32 %v149, %v1043
    %v1045 = vmul.f32 %v150, %v1043
    %v1046 = vmul.f32 %v151, %v1043
    %v1047 = vmul.f32 %v152, %v1043
    %v1052 = vrot.slane %v1044, 1
    %v1053 = vrot.slane %v1045, 1
    %v1054 = vsel %vm243, %v1052, %v1053
    %v1055 = vrot.slane %v1046, 1
    %v1056 = vrot.slane %v1047, 1
    %v1057 = vsel %vm243, %v1055, %v1056
    %v1060 = vadd.f32 %v986, %v1054
    %v1061 = vadd.f32 %v987, %v1057
    %s1062 = sld [smem:[#allocation5 + $0x6f]]
    %v1063 = vstv %s1062
    %v1064 = vmul.f32 %v149, %v1063
    %v1065 = vmul.f32 %v150, %v1063
    %v1066 = vmul.f32 %v151, %v1063
    %v1067 = vmul.f32 %v152, %v1063
    %v1072 = vrot.slane %v1064, 1
    %v1073 = vrot.slane %v1065, 1
    %v1074 = vsel %vm243, %v1072, %v1073
    %v1075 = vrot.slane %v1066, 1
    %v1076 = vrot.slane %v1067, 1
    %v1077 = vsel %vm243, %v1075, %v1076
    %v1080 = vadd.f32 %v1000, %v1074
    %v1081 = vadd.f32 %v1001, %v1077
    %s1082 = sld [smem:[#allocation5 + $0x8c]]
    %v1083 = vstv %s1082
    %v1084 = vmul.f32 %v149, %v1083
    %v1085 = vmul.f32 %v150, %v1083
    %v1086 = vmul.f32 %v151, %v1083
    %v1087 = vmul.f32 %v152, %v1083
    %v1092 = vrot.slane %v1084, 1
    %v1093 = vrot.slane %v1085, 1
    %v1094 = vsel %vm243, %v1092, %v1093
    %v1095 = vrot.slane %v1086, 1
    %v1096 = vrot.slane %v1087, 1
    %v1097 = vsel %vm243, %v1095, %v1096
    %1098 = vrot.lane.b32.xlu0 %v1094, 127
    %v1099 = vpop.permute.xlu0 %1098
    %1100 = vrot.lane.b32.xlu0 %v1097, 127
    %v1101 = vpop.permute.xlu0 %1100
    %v1104 = vadd.f32 %v1020, %v1099
    %v1105 = vadd.f32 %v1021, %v1101
    %s1106 = sld [smem:[#allocation5 + $0x8d]]
    %v1107 = vstv %s1106
    %v1108 = vmul.f32 %v149, %v1107
    %v1109 = vmul.f32 %v150, %v1107
    %v1110 = vmul.f32 %v151, %v1107
    %v1111 = vmul.f32 %v152, %v1107
    %v1116 = vrot.slane %v1108, 1
    %v1117 = vrot.slane %v1109, 1
    %v1118 = vsel %vm243, %v1116, %v1117
    %v1119 = vrot.slane %v1110, 1
    %v1120 = vrot.slane %v1111, 1
    %v1121 = vsel %vm243, %v1119, %v1120
    %1122 = vrot.lane.b32.xlu0 %v1118, 127
    %v1123 = vpop.permute.xlu0 %1122
    %1124 = vrot.lane.b32.xlu0 %v1121, 127
    %v1125 = vpop.permute.xlu0 %1124
    %v1128 = vadd.f32 %v1040, %v1123
    %v1129 = vadd.f32 %v1041, %v1125
    %s1130 = sld [smem:[#allocation5 + $0x8e]]
    %v1131 = vstv %s1130
    %v1132 = vmul.f32 %v149, %v1131
    %v1133 = vmul.f32 %v150, %v1131
    %v1134 = vmul.f32 %v151, %v1131
    %v1135 = vmul.f32 %v152, %v1131
    %v1140 = vrot.slane %v1132, 1
    %v1141 = vrot.slane %v1133, 1
    %v1142 = vsel %vm243, %v1140, %v1141
    %v1143 = vrot.slane %v1134, 1
    %v1144 = vrot.slane %v1135, 1
    %v1145 = vsel %vm243, %v1143, %v1144
    %1146 = vrot.lane.b32.xlu0 %v1142, 127
    %v1147 = vpop.permute.xlu0 %1146
    %1148 = vrot.lane.b32.xlu0 %v1145, 127
    %v1149 = vpop.permute.xlu0 %1148
    %v1152 = vadd.f32 %v1060, %v1147
    %v1153 = vadd.f32 %v1061, %v1149
    %s1154 = sld [smem:[#allocation5 + $0x8f]]
    %v1155 = vstv %s1154
    %v1156 = vmul.f32 %v149, %v1155
    %v1157 = vmul.f32 %v150, %v1155
    %v1158 = vmul.f32 %v151, %v1155
    %v1159 = vmul.f32 %v152, %v1155
    %v1164 = vrot.slane %v1156, 1
    %v1165 = vrot.slane %v1157, 1
    %v1166 = vsel %vm243, %v1164, %v1165
    %v1167 = vrot.slane %v1158, 1
    %v1168 = vrot.slane %v1159, 1
    %v1169 = vsel %vm243, %v1167, %v1168
    %1170 = vrot.lane.b32.xlu0 %v1166, 127
    %v1171 = vpop.permute.xlu0 %1170
    %1172 = vrot.lane.b32.xlu0 %v1169, 127
    %v1173 = vpop.permute.xlu0 %1172
    %v1176 = vadd.f32 %v1080, %v1171
    %v1177 = vadd.f32 %v1081, %v1173
    %s1178 = scalar_lea.vmem %s0, 64
    %v1179 = vld [vmem:[%s1178] sm:$0xff]
    %v1180 = vld [vmem:[%s1178 + $0x8] sm:$0x1]
    %v1181 = vld [vmem:[%s1178 + $0x100] sm:$0xff]
    %v1182 = vld [vmem:[%s1178 + $0x108] sm:$0x1]
    %s1183 = scalar_lea.vmem %s0, 80
    %v1184 = vld [vmem:[%s1183] sm:$0xff]
    %v1185 = vld [vmem:[%s1183 + $0x8] sm:$0x1]
    %v1186 = vld [vmem:[%s1183 + $0x100] sm:$0xff]
    %v1187 = vld [vmem:[%s1183 + $0x108] sm:$0x1]
    %s1188 = scalar_lea.vmem %s0, 96
    %v1189 = vld [vmem:[%s1188] sm:$0xff]
    %v1190 = vld [vmem:[%s1188 + $0x8] sm:$0x1]
    %v1191 = vld [vmem:[%s1188 + $0x100] sm:$0xff]
    %v1192 = vld [vmem:[%s1188 + $0x108] sm:$0x1]
    %s1193 = scalar_lea.vmem %s0, 112
    %v1194 = vld [vmem:[%s1193] sm:$0xff]
    %v1195 = vld [vmem:[%s1193 + $0x8] sm:$0x1]
    %v1196 = vld [vmem:[%s1193 + $0x100] sm:$0xff]
    %v1197 = vld [vmem:[%s1193 + $0x108] sm:$0x1]
    %v1198 = vmul.f32 %v1179, %v1179
    %v1199 = vmul.f32 %v1180, %v1180
    %v1200 = vmul.f32 %v1181, %v1181
    %v1201 = vmul.f32 %v1182, %v1182
    %v1202 = vmul.f32 %v1184, %v1184
    %v1203 = vmul.f32 %v1185, %v1185
    %v1204 = vmul.f32 %v1186, %v1186
    %v1205 = vmul.f32 %v1187, %v1187
    %v1206 = vadd.f32 %v1198, %v1202
    %v1207 = vadd.f32 %v1199, %v1203
    %v1208 = vadd.f32 %v1200, %v1204
    %v1209 = vadd.f32 %v1201, %v1205
    %v1210 = vmul.f32 %v1189, %v1189
    %v1211 = vmul.f32 %v1190, %v1190
    %v1212 = vmul.f32 %v1191, %v1191
    %v1213 = vmul.f32 %v1192, %v1192
    %v1214 = vadd.f32 %v1206, %v1210
    %v1215 = vadd.f32 %v1207, %v1211
    %v1216 = vadd.f32 %v1208, %v1212
    %v1217 = vadd.f32 %v1209, %v1213
    %v1218 = vmul.f32 %v1194, %v1194
    %v1219 = vmul.f32 %v1195, %v1195
    %v1220 = vmul.f32 %v1196, %v1196
    %v1221 = vmul.f32 %v1197, %v1197
    %v1222 = vadd.f32 %v1214, %v1218
    %v1223 = vadd.f32 %v1215, %v1219
    %v1224 = vadd.f32 %v1216, %v1220
    %v1225 = vadd.f32 %v1217, %v1221
    %v1226 = vmul.f32 %v1222, 0.25
    %v1227 = vmul.f32 %v1223, 0.25
    %v1228 = vmul.f32 %v1224, 0.25
    %v1229 = vmul.f32 %v1225, 0.25
    %v1230 = vadd.f32 %v1226, 1e-05
    %v1231 = vadd.f32 %v1227, 1e-05
    %v1232 = vadd.f32 %v1228, 1e-05
    %v1233 = vadd.f32 %v1229, 1e-05
    %v1234 = vrsqrt.pop %v1230
    %v1235 = vrsqrt.pop %v1231
    %v1236 = vrsqrt.pop %v1232
    %v1237 = vrsqrt.pop %v1233
    %v1238 = vmul.f32 %v1179, %v1234
    %v1239 = vmul.f32 %v1180, %v1235
    %v1240 = vmul.f32 %v1181, %v1236
    %v1241 = vmul.f32 %v1182, %v1237
    %v1242 = vmul.f32 %v1238, %v118
    %v1243 = vmul.f32 %v1239, %v118
    %v1244 = vmul.f32 %v1240, %v118
    %v1245 = vmul.f32 %v1241, %v118
    %v1246 = vmul.f32 %v1184, %v1234
    %v1247 = vmul.f32 %v1185, %v1235
    %v1248 = vmul.f32 %v1186, %v1236
    %v1249 = vmul.f32 %v1187, %v1237
    %v1250 = vmul.f32 %v1246, %v128
    %v1251 = vmul.f32 %v1247, %v128
    %v1252 = vmul.f32 %v1248, %v128
    %v1253 = vmul.f32 %v1249, %v128
    %v1254 = vmul.f32 %v1189, %v1234
    %v1255 = vmul.f32 %v1190, %v1235
    %v1256 = vmul.f32 %v1191, %v1236
    %v1257 = vmul.f32 %v1192, %v1237
    %v1258 = vmul.f32 %v1254, %v138
    %v1259 = vmul.f32 %v1255, %v138
    %v1260 = vmul.f32 %v1256, %v138
    %v1261 = vmul.f32 %v1257, %v138
    %v1262 = vmul.f32 %v1194, %v1234
    %v1263 = vmul.f32 %v1195, %v1235
    %v1264 = vmul.f32 %v1196, %v1236
    %v1265 = vmul.f32 %v1197, %v1237
    %v1266 = vmul.f32 %v1262, %v148
    %v1267 = vmul.f32 %v1263, %v148
    %v1268 = vmul.f32 %v1264, %v148
    %v1269 = vmul.f32 %v1265, %v148
    %s1270 = sld [smem:[#allocation5 + $0x10]]
    %v1271 = vstv %s1270
    %v1272 = vmul.f32 %v1242, %v1271
    %v1273 = vmul.f32 %v1244, %v1271
    %v1274 = vadd.f32 %v1104, %v1272
    %v1275 = vadd.f32 %v1105, %v1273
    %s1276 = sld [smem:[#allocation5 + $0x11]]
    %v1277 = vstv %s1276
    %v1278 = vmul.f32 %v1242, %v1277
    %v1279 = vmul.f32 %v1244, %v1277
    %v1280 = vadd.f32 %v1128, %v1278
    %v1281 = vadd.f32 %v1129, %v1279
    %s1282 = sld [smem:[#allocation5 + $0x12]]
    %v1283 = vstv %s1282
    %v1284 = vmul.f32 %v1242, %v1283
    %v1285 = vmul.f32 %v1244, %v1283
    %v1286 = vadd.f32 %v1152, %v1284
    %v1287 = vadd.f32 %v1153, %v1285
    %s1288 = sld [smem:[#allocation5 + $0x13]]
    %v1289 = vstv %s1288
    %v1290 = vmul.f32 %v1242, %v1289
    %v1291 = vmul.f32 %v1244, %v1289
    %v1292 = vadd.f32 %v1176, %v1290
    %v1293 = vadd.f32 %v1177, %v1291
    %s1294 = sld [smem:[#allocation5 + $0x70]]
    %v1295 = vstv %s1294
    %v1296 = vmul.f32 %v1242, %v1295
    %v1297 = vmul.f32 %v1243, %v1295
    %v1298 = vmul.f32 %v1244, %v1295
    %v1299 = vmul.f32 %v1245, %v1295
    %v1304 = vrot.slane %v1296, 1
    %v1305 = vrot.slane %v1297, 1
    %v1306 = vsel %vm243, %v1304, %v1305
    %v1307 = vrot.slane %v1298, 1
    %v1308 = vrot.slane %v1299, 1
    %v1309 = vsel %vm243, %v1307, %v1308
    %v1312 = vadd.f32 %v1274, %v1306
    %v1313 = vadd.f32 %v1275, %v1309
    %s1314 = sld [smem:[#allocation5 + $0x71]]
    %v1315 = vstv %s1314
    %v1316 = vmul.f32 %v1242, %v1315
    %v1317 = vmul.f32 %v1243, %v1315
    %v1318 = vmul.f32 %v1244, %v1315
    %v1319 = vmul.f32 %v1245, %v1315
    %v1324 = vrot.slane %v1316, 1
    %v1325 = vrot.slane %v1317, 1
    %v1326 = vsel %vm243, %v1324, %v1325
    %v1327 = vrot.slane %v1318, 1
    %v1328 = vrot.slane %v1319, 1
    %v1329 = vsel %vm243, %v1327, %v1328
    %v1332 = vadd.f32 %v1280, %v1326
    %v1333 = vadd.f32 %v1281, %v1329
    %s1334 = sld [smem:[#allocation5 + $0x72]]
    %v1335 = vstv %s1334
    %v1336 = vmul.f32 %v1242, %v1335
    %v1337 = vmul.f32 %v1243, %v1335
    %v1338 = vmul.f32 %v1244, %v1335
    %v1339 = vmul.f32 %v1245, %v1335
    %v1344 = vrot.slane %v1336, 1
    %v1345 = vrot.slane %v1337, 1
    %v1346 = vsel %vm243, %v1344, %v1345
    %v1347 = vrot.slane %v1338, 1
    %v1348 = vrot.slane %v1339, 1
    %v1349 = vsel %vm243, %v1347, %v1348
    %v1352 = vadd.f32 %v1286, %v1346
    %v1353 = vadd.f32 %v1287, %v1349
    %s1354 = sld [smem:[#allocation5 + $0x73]]
    %v1355 = vstv %s1354
    %v1356 = vmul.f32 %v1242, %v1355
    %v1357 = vmul.f32 %v1243, %v1355
    %v1358 = vmul.f32 %v1244, %v1355
    %v1359 = vmul.f32 %v1245, %v1355
    %v1364 = vrot.slane %v1356, 1
    %v1365 = vrot.slane %v1357, 1
    %v1366 = vsel %vm243, %v1364, %v1365
    %v1367 = vrot.slane %v1358, 1
    %v1368 = vrot.slane %v1359, 1
    %v1369 = vsel %vm243, %v1367, %v1368
    %v1372 = vadd.f32 %v1292, %v1366
    %v1373 = vadd.f32 %v1293, %v1369
    %s1374 = sld [smem:[#allocation5 + $0x14]]
    %v1375 = vstv %s1374
    %v1376 = vmul.f32 %v1250, %v1375
    %v1377 = vmul.f32 %v1252, %v1375
    %v1378 = vadd.f32 %v1312, %v1376
    %v1379 = vadd.f32 %v1313, %v1377
    %s1380 = sld [smem:[#allocation5 + $0x15]]
    %v1381 = vstv %s1380
    %v1382 = vmul.f32 %v1250, %v1381
    %v1383 = vmul.f32 %v1252, %v1381
    %v1384 = vadd.f32 %v1332, %v1382
    %v1385 = vadd.f32 %v1333, %v1383
    %s1386 = sld [smem:[#allocation5 + $0x16]]
    %v1387 = vstv %s1386
    %v1388 = vmul.f32 %v1250, %v1387
    %v1389 = vmul.f32 %v1252, %v1387
    %v1390 = vadd.f32 %v1352, %v1388
    %v1391 = vadd.f32 %v1353, %v1389
    %s1392 = sld [smem:[#allocation5 + $0x17]]
    %v1393 = vstv %s1392
    %v1394 = vmul.f32 %v1250, %v1393
    %v1395 = vmul.f32 %v1252, %v1393
    %v1396 = vadd.f32 %v1372, %v1394
    %v1397 = vadd.f32 %v1373, %v1395
    %s1398 = sld [smem:[#allocation5 + $0x74]]
    %v1399 = vstv %s1398
    %v1400 = vmul.f32 %v1250, %v1399
    %v1401 = vmul.f32 %v1251, %v1399
    %v1402 = vmul.f32 %v1252, %v1399
    %v1403 = vmul.f32 %v1253, %v1399
    %v1408 = vrot.slane %v1400, 1
    %v1409 = vrot.slane %v1401, 1
    %v1410 = vsel %vm243, %v1408, %v1409
    %v1411 = vrot.slane %v1402, 1
    %v1412 = vrot.slane %v1403, 1
    %v1413 = vsel %vm243, %v1411, %v1412
    %v1416 = vadd.f32 %v1378, %v1410
    %v1417 = vadd.f32 %v1379, %v1413
    %s1418 = sld [smem:[#allocation5 + $0x75]]
    %v1419 = vstv %s1418
    %v1420 = vmul.f32 %v1250, %v1419
    %v1421 = vmul.f32 %v1251, %v1419
    %v1422 = vmul.f32 %v1252, %v1419
    %v1423 = vmul.f32 %v1253, %v1419
    %v1428 = vrot.slane %v1420, 1
    %v1429 = vrot.slane %v1421, 1
    %v1430 = vsel %vm243, %v1428, %v1429
    %v1431 = vrot.slane %v1422, 1
    %v1432 = vrot.slane %v1423, 1
    %v1433 = vsel %vm243, %v1431, %v1432
    %v1436 = vadd.f32 %v1384, %v1430
    %v1437 = vadd.f32 %v1385, %v1433
    %s1438 = sld [smem:[#allocation5 + $0x76]]
    %v1439 = vstv %s1438
    %v1440 = vmul.f32 %v1250, %v1439
    %v1441 = vmul.f32 %v1251, %v1439
    %v1442 = vmul.f32 %v1252, %v1439
    %v1443 = vmul.f32 %v1253, %v1439
    %v1448 = vrot.slane %v1440, 1
    %v1449 = vrot.slane %v1441, 1
    %v1450 = vsel %vm243, %v1448, %v1449
    %v1451 = vrot.slane %v1442, 1
    %v1452 = vrot.slane %v1443, 1
    %v1453 = vsel %vm243, %v1451, %v1452
    %v1456 = vadd.f32 %v1390, %v1450
    %v1457 = vadd.f32 %v1391, %v1453
    %s1458 = sld [smem:[#allocation5 + $0x77]]
    %v1459 = vstv %s1458
    %v1460 = vmul.f32 %v1250, %v1459
    %v1461 = vmul.f32 %v1251, %v1459
    %v1462 = vmul.f32 %v1252, %v1459
    %v1463 = vmul.f32 %v1253, %v1459
    %v1468 = vrot.slane %v1460, 1
    %v1469 = vrot.slane %v1461, 1
    %v1470 = vsel %vm243, %v1468, %v1469
    %v1471 = vrot.slane %v1462, 1
    %v1472 = vrot.slane %v1463, 1
    %v1473 = vsel %vm243, %v1471, %v1472
    %v1476 = vadd.f32 %v1396, %v1470
    %v1477 = vadd.f32 %v1397, %v1473
    %s1478 = sld [smem:[#allocation5 + $0x18]]
    %v1479 = vstv %s1478
    %v1480 = vmul.f32 %v1258, %v1479
    %v1481 = vmul.f32 %v1260, %v1479
    %v1482 = vadd.f32 %v1416, %v1480
    %v1483 = vadd.f32 %v1417, %v1481
    %s1484 = sld [smem:[#allocation5 + $0x19]]
    %v1485 = vstv %s1484
    %v1486 = vmul.f32 %v1258, %v1485
    %v1487 = vmul.f32 %v1260, %v1485
    %v1488 = vadd.f32 %v1436, %v1486
    %v1489 = vadd.f32 %v1437, %v1487
    %s1490 = sld [smem:[#allocation5 + $0x1a]]
    %v1491 = vstv %s1490
    %v1492 = vmul.f32 %v1258, %v1491
    %v1493 = vmul.f32 %v1260, %v1491
    %v1494 = vadd.f32 %v1456, %v1492
    %v1495 = vadd.f32 %v1457, %v1493
    %s1496 = sld [smem:[#allocation5 + $0x1b]]
    %v1497 = vstv %s1496
    %v1498 = vmul.f32 %v1258, %v1497
    %v1499 = vmul.f32 %v1260, %v1497
    %v1500 = vadd.f32 %v1476, %v1498
    %v1501 = vadd.f32 %v1477, %v1499
    %s1502 = sld [smem:[#allocation5 + $0x78]]
    %v1503 = vstv %s1502
    %v1504 = vmul.f32 %v1258, %v1503
    %v1505 = vmul.f32 %v1259, %v1503
    %v1506 = vmul.f32 %v1260, %v1503
    %v1507 = vmul.f32 %v1261, %v1503
    %v1512 = vrot.slane %v1504, 1
    %v1513 = vrot.slane %v1505, 1
    %v1514 = vsel %vm243, %v1512, %v1513
    %v1515 = vrot.slane %v1506, 1
    %v1516 = vrot.slane %v1507, 1
    %v1517 = vsel %vm243, %v1515, %v1516
    %v1520 = vadd.f32 %v1482, %v1514
    %v1521 = vadd.f32 %v1483, %v1517
    %s1522 = sld [smem:[#allocation5 + $0x79]]
    %v1523 = vstv %s1522
    %v1524 = vmul.f32 %v1258, %v1523
    %v1525 = vmul.f32 %v1259, %v1523
    %v1526 = vmul.f32 %v1260, %v1523
    %v1527 = vmul.f32 %v1261, %v1523
    %v1532 = vrot.slane %v1524, 1
    %v1533 = vrot.slane %v1525, 1
    %v1534 = vsel %vm243, %v1532, %v1533
    %v1535 = vrot.slane %v1526, 1
    %v1536 = vrot.slane %v1527, 1
    %v1537 = vsel %vm243, %v1535, %v1536
    %v1540 = vadd.f32 %v1488, %v1534
    %v1541 = vadd.f32 %v1489, %v1537
    %s1542 = sld [smem:[#allocation5 + $0x7a]]
    %v1543 = vstv %s1542
    %v1544 = vmul.f32 %v1258, %v1543
    %v1545 = vmul.f32 %v1259, %v1543
    %v1546 = vmul.f32 %v1260, %v1543
    %v1547 = vmul.f32 %v1261, %v1543
    %v1552 = vrot.slane %v1544, 1
    %v1553 = vrot.slane %v1545, 1
    %v1554 = vsel %vm243, %v1552, %v1553
    %v1555 = vrot.slane %v1546, 1
    %v1556 = vrot.slane %v1547, 1
    %v1557 = vsel %vm243, %v1555, %v1556
    %v1560 = vadd.f32 %v1494, %v1554
    %v1561 = vadd.f32 %v1495, %v1557
    %s1562 = sld [smem:[#allocation5 + $0x7b]]
    %v1563 = vstv %s1562
    %v1564 = vmul.f32 %v1258, %v1563
    %v1565 = vmul.f32 %v1259, %v1563
    %v1566 = vmul.f32 %v1260, %v1563
    %v1567 = vmul.f32 %v1261, %v1563
    %v1572 = vrot.slane %v1564, 1
    %v1573 = vrot.slane %v1565, 1
    %v1574 = vsel %vm243, %v1572, %v1573
    %v1575 = vrot.slane %v1566, 1
    %v1576 = vrot.slane %v1567, 1
    %v1577 = vsel %vm243, %v1575, %v1576
    %v1580 = vadd.f32 %v1500, %v1574
    %v1581 = vadd.f32 %v1501, %v1577
    %s1582 = sld [smem:[#allocation5 + $0x1c]]
    %v1583 = vstv %s1582
    %v1584 = vmul.f32 %v1266, %v1583
    %v1585 = vmul.f32 %v1268, %v1583
    %v1586 = vadd.f32 %v1520, %v1584
    %v1587 = vadd.f32 %v1521, %v1585
    %s1588 = sld [smem:[#allocation5 + $0x1d]]
    %v1589 = vstv %s1588
    %v1590 = vmul.f32 %v1266, %v1589
    %v1591 = vmul.f32 %v1268, %v1589
    %v1592 = vadd.f32 %v1540, %v1590
    %v1593 = vadd.f32 %v1541, %v1591
    %s1594 = sld [smem:[#allocation5 + $0x1e]]
    %v1595 = vstv %s1594
    %v1596 = vmul.f32 %v1266, %v1595
    %v1597 = vmul.f32 %v1268, %v1595
    %v1598 = vadd.f32 %v1560, %v1596
    %v1599 = vadd.f32 %v1561, %v1597
    %s1600 = sld [smem:[#allocation5 + $0x1f]]
    %v1601 = vstv %s1600
    %v1602 = vmul.f32 %v1266, %v1601
    %v1603 = vmul.f32 %v1268, %v1601
    %v1604 = vadd.f32 %v1580, %v1602
    %v1605 = vadd.f32 %v1581, %v1603
    %s1606 = sld [smem:[#allocation5 + $0x7c]]
    %v1607 = vstv %s1606
    %v1608 = vmul.f32 %v1266, %v1607
    %v1609 = vmul.f32 %v1267, %v1607
    %v1610 = vmul.f32 %v1268, %v1607
    %v1611 = vmul.f32 %v1269, %v1607
    %v1616 = vrot.slane %v1608, 1
    %v1617 = vrot.slane %v1609, 1
    %v1618 = vsel %vm243, %v1616, %v1617
    %v1619 = vrot.slane %v1610, 1
    %v1620 = vrot.slane %v1611, 1
    %v1621 = vsel %vm243, %v1619, %v1620
    %v1624 = vadd.f32 %v1586, %v1618
    %v1625 = vadd.f32 %v1587, %v1621
    %s1626 = sld [smem:[#allocation5 + $0x7d]]
    %v1627 = vstv %s1626
    %v1628 = vmul.f32 %v1266, %v1627
    %v1629 = vmul.f32 %v1267, %v1627
    %v1630 = vmul.f32 %v1268, %v1627
    %v1631 = vmul.f32 %v1269, %v1627
    %v1636 = vrot.slane %v1628, 1
    %v1637 = vrot.slane %v1629, 1
    %v1638 = vsel %vm243, %v1636, %v1637
    %v1639 = vrot.slane %v1630, 1
    %v1640 = vrot.slane %v1631, 1
    %v1641 = vsel %vm243, %v1639, %v1640
    %v1644 = vadd.f32 %v1592, %v1638
    %v1645 = vadd.f32 %v1593, %v1641
    %s1646 = sld [smem:[#allocation5 + $0x7e]]
    %v1647 = vstv %s1646
    %v1648 = vmul.f32 %v1266, %v1647
    %v1649 = vmul.f32 %v1267, %v1647
    %v1650 = vmul.f32 %v1268, %v1647
    %v1651 = vmul.f32 %v1269, %v1647
    %v1656 = vrot.slane %v1648, 1
    %v1657 = vrot.slane %v1649, 1
    %v1658 = vsel %vm243, %v1656, %v1657
    %v1659 = vrot.slane %v1650, 1
    %v1660 = vrot.slane %v1651, 1
    %v1661 = vsel %vm243, %v1659, %v1660
    %v1664 = vadd.f32 %v1598, %v1658
    %v1665 = vadd.f32 %v1599, %v1661
    %s1666 = sld [smem:[#allocation5 + $0x7f]]
    %v1667 = vstv %s1666
    %v1668 = vmul.f32 %v1266, %v1667
    %v1669 = vmul.f32 %v1267, %v1667
    %v1670 = vmul.f32 %v1268, %v1667
    %v1671 = vmul.f32 %v1269, %v1667
    %v1676 = vrot.slane %v1668, 1
    %v1677 = vrot.slane %v1669, 1
    %v1678 = vsel %vm243, %v1676, %v1677
    %v1679 = vrot.slane %v1670, 1
    %v1680 = vrot.slane %v1671, 1
    %v1681 = vsel %vm243, %v1679, %v1680
    %v1684 = vadd.f32 %v1604, %v1678
    %v1685 = vadd.f32 %v1605, %v1681
    %s1686 = scalar_lea.vmem %s0, 128
    %v1687 = vld [vmem:[%s1686] sm:$0xff]
    %v1688 = vld [vmem:[%s1686 + $0x100] sm:$0xff]
    %s1689 = scalar_lea.vmem %s0, 144
    %v1690 = vld [vmem:[%s1689] sm:$0xff]
    %v1691 = vld [vmem:[%s1689 + $0x100] sm:$0xff]
    %s1692 = scalar_lea.vmem %s0, 160
    %v1693 = vld [vmem:[%s1692] sm:$0xff]
    %v1694 = vld [vmem:[%s1692 + $0x100] sm:$0xff]
    %s1695 = scalar_lea.vmem %s0, 176
    %v1696 = vld [vmem:[%s1695] sm:$0xff]
    %v1697 = vld [vmem:[%s1695 + $0x100] sm:$0xff]
    %v1698 = vmul.f32 %v1687, %v1687
    %v1699 = vmul.f32 %v1688, %v1688
    %v1700 = vmul.f32 %v1690, %v1690
    %v1701 = vmul.f32 %v1691, %v1691
    %v1702 = vadd.f32 %v1698, %v1700
    %v1703 = vadd.f32 %v1699, %v1701
    %v1704 = vmul.f32 %v1693, %v1693
    %v1705 = vmul.f32 %v1694, %v1694
    %v1706 = vadd.f32 %v1702, %v1704
    %v1707 = vadd.f32 %v1703, %v1705
    %v1708 = vmul.f32 %v1696, %v1696
    %v1709 = vmul.f32 %v1697, %v1697
    %v1710 = vadd.f32 %v1706, %v1708
    %v1711 = vadd.f32 %v1707, %v1709
    %v1712 = vmul.f32 %v1710, 0.25
    %v1713 = vmul.f32 %v1711, 0.25
    %v1714 = vadd.f32 %v1712, 1e-05
    %v1715 = vadd.f32 %v1713, 1e-05
    %v1716 = vrsqrt.pop %v1714
    %v1717 = vrsqrt.pop %v1715
    %v1718 = vmul.f32 %v1687, %v1716
    %v1719 = vmul.f32 %v1688, %v1717
    %v1720 = vmul.f32 %v1718, %v118
    %v1721 = vmul.f32 %v1719, %v118
    %v1722 = vmul.f32 %v1690, %v1716
    %v1723 = vmul.f32 %v1691, %v1717
    %v1724 = vmul.f32 %v1722, %v128
    %v1725 = vmul.f32 %v1723, %v128
    %v1726 = vmul.f32 %v1693, %v1716
    %v1727 = vmul.f32 %v1694, %v1717
    %v1728 = vmul.f32 %v1726, %v138
    %v1729 = vmul.f32 %v1727, %v138
    %v1730 = vmul.f32 %v1696, %v1716
    %v1731 = vmul.f32 %v1697, %v1717
    %v1732 = vmul.f32 %v1730, %v148
    %v1733 = vmul.f32 %v1731, %v148
    %s1734 = sld [smem:[#allocation5 + $0x30]]
    %v1735 = vstv %s1734
    %v1736 = vmul.f32 %v1720, %v1735
    %v1737 = vmul.f32 %v1721, %v1735
    %v1738 = vadd.f32 %v1624, %v1736
    %v1739 = vadd.f32 %v1625, %v1737
    %s1740 = sld [smem:[#allocation5 + $0x31]]
    %v1741 = vstv %s1740
    %v1742 = vmul.f32 %v1720, %v1741
    %v1743 = vmul.f32 %v1721, %v1741
    %v1744 = vadd.f32 %v1644, %v1742
    %v1745 = vadd.f32 %v1645, %v1743
    %s1746 = sld [smem:[#allocation5 + $0x32]]
    %v1747 = vstv %s1746
    %v1748 = vmul.f32 %v1720, %v1747
    %v1749 = vmul.f32 %v1721, %v1747
    %v1750 = vadd.f32 %v1664, %v1748
    %v1751 = vadd.f32 %v1665, %v1749
    %s1752 = sld [smem:[#allocation5 + $0x33]]
    %v1753 = vstv %s1752
    %v1754 = vmul.f32 %v1720, %v1753
    %v1755 = vmul.f32 %v1721, %v1753
    %v1756 = vadd.f32 %v1684, %v1754
    %v1757 = vadd.f32 %v1685, %v1755
    %s1758 = sld [smem:[#allocation5 + $0x50]]
    %v1759 = vstv %s1758
    %v1760 = vmul.f32 %v1720, %v1759
    %v1761 = vmul.f32 %v1721, %v1759
    %1764 = vrot.lane.b32.xlu0 %v1760, 127
    %v1765 = vpop.permute.xlu0 %1764
    %1766 = vrot.lane.b32.xlu0 %v1761, 127
    %v1767 = vpop.permute.xlu0 %1766
    %v1770 = vadd.f32 %v1738, %v1765
    %v1771 = vadd.f32 %v1739, %v1767
    %s1772 = sld [smem:[#allocation5 + $0x51]]
    %v1773 = vstv %s1772
    %v1774 = vmul.f32 %v1720, %v1773
    %v1775 = vmul.f32 %v1721, %v1773
    %1778 = vrot.lane.b32.xlu0 %v1774, 127
    %v1779 = vpop.permute.xlu0 %1778
    %1780 = vrot.lane.b32.xlu0 %v1775, 127
    %v1781 = vpop.permute.xlu0 %1780
    %v1784 = vadd.f32 %v1744, %v1779
    %v1785 = vadd.f32 %v1745, %v1781
    %s1786 = sld [smem:[#allocation5 + $0x52]]
    %v1787 = vstv %s1786
    %v1788 = vmul.f32 %v1720, %v1787
    %v1789 = vmul.f32 %v1721, %v1787
    %1792 = vrot.lane.b32.xlu0 %v1788, 127
    %v1793 = vpop.permute.xlu0 %1792
    %1794 = vrot.lane.b32.xlu0 %v1789, 127
    %v1795 = vpop.permute.xlu0 %1794
    %v1798 = vadd.f32 %v1750, %v1793
    %v1799 = vadd.f32 %v1751, %v1795
    %s1800 = sld [smem:[#allocation5 + $0x53]]
    %v1801 = vstv %s1800
    %v1802 = vmul.f32 %v1720, %v1801
    %v1803 = vmul.f32 %v1721, %v1801
    %1806 = vrot.lane.b32.xlu0 %v1802, 127
    %v1807 = vpop.permute.xlu0 %1806
    %1808 = vrot.lane.b32.xlu0 %v1803, 127
    %v1809 = vpop.permute.xlu0 %1808
    %v1812 = vadd.f32 %v1756, %v1807
    %v1813 = vadd.f32 %v1757, %v1809
    %s1814 = sld [smem:[#allocation5 + $0x34]]
    %v1815 = vstv %s1814
    %v1816 = vmul.f32 %v1724, %v1815
    %v1817 = vmul.f32 %v1725, %v1815
    %v1818 = vadd.f32 %v1770, %v1816
    %v1819 = vadd.f32 %v1771, %v1817
    %s1820 = sld [smem:[#allocation5 + $0x35]]
    %v1821 = vstv %s1820
    %v1822 = vmul.f32 %v1724, %v1821
    %v1823 = vmul.f32 %v1725, %v1821
    %v1824 = vadd.f32 %v1784, %v1822
    %v1825 = vadd.f32 %v1785, %v1823
    %s1826 = sld [smem:[#allocation5 + $0x36]]
    %v1827 = vstv %s1826
    %v1828 = vmul.f32 %v1724, %v1827
    %v1829 = vmul.f32 %v1725, %v1827
    %v1830 = vadd.f32 %v1798, %v1828
    %v1831 = vadd.f32 %v1799, %v1829
    %s1832 = sld [smem:[#allocation5 + $0x37]]
    %v1833 = vstv %s1832
    %v1834 = vmul.f32 %v1724, %v1833
    %v1835 = vmul.f32 %v1725, %v1833
    %v1836 = vadd.f32 %v1812, %v1834
    %v1837 = vadd.f32 %v1813, %v1835
    %s1838 = sld [smem:[#allocation5 + $0x54]]
    %v1839 = vstv %s1838
    %v1840 = vmul.f32 %v1724, %v1839
    %v1841 = vmul.f32 %v1725, %v1839
    %1844 = vrot.lane.b32.xlu0 %v1840, 127
    %v1845 = vpop.permute.xlu0 %1844
    %1846 = vrot.lane.b32.xlu0 %v1841, 127
    %v1847 = vpop.permute.xlu0 %1846
    %v1850 = vadd.f32 %v1818, %v1845
    %v1851 = vadd.f32 %v1819, %v1847
    %s1852 = sld [smem:[#allocation5 + $0x55]]
    %v1853 = vstv %s1852
    %v1854 = vmul.f32 %v1724, %v1853
    %v1855 = vmul.f32 %v1725, %v1853
    %1858 = vrot.lane.b32.xlu0 %v1854, 127
    %v1859 = vpop.permute.xlu0 %1858
    %1860 = vrot.lane.b32.xlu0 %v1855, 127
    %v1861 = vpop.permute.xlu0 %1860
    %v1864 = vadd.f32 %v1824, %v1859
    %v1865 = vadd.f32 %v1825, %v1861
    %s1866 = sld [smem:[#allocation5 + $0x56]]
    %v1867 = vstv %s1866
    %v1868 = vmul.f32 %v1724, %v1867
    %v1869 = vmul.f32 %v1725, %v1867
    %1872 = vrot.lane.b32.xlu0 %v1868, 127
    %v1873 = vpop.permute.xlu0 %1872
    %1874 = vrot.lane.b32.xlu0 %v1869, 127
    %v1875 = vpop.permute.xlu0 %1874
    %v1878 = vadd.f32 %v1830, %v1873
    %v1879 = vadd.f32 %v1831, %v1875
    %s1880 = sld [smem:[#allocation5 + $0x57]]
    %v1881 = vstv %s1880
    %v1882 = vmul.f32 %v1724, %v1881
    %v1883 = vmul.f32 %v1725, %v1881
    %1886 = vrot.lane.b32.xlu0 %v1882, 127
    %v1887 = vpop.permute.xlu0 %1886
    %1888 = vrot.lane.b32.xlu0 %v1883, 127
    %v1889 = vpop.permute.xlu0 %1888
    %v1892 = vadd.f32 %v1836, %v1887
    %v1893 = vadd.f32 %v1837, %v1889
    %s1894 = sld [smem:[#allocation5 + $0x38]]
    %v1895 = vstv %s1894
    %v1896 = vmul.f32 %v1728, %v1895
    %v1897 = vmul.f32 %v1729, %v1895
    %v1898 = vadd.f32 %v1850, %v1896
    %v1899 = vadd.f32 %v1851, %v1897
    %s1900 = sld [smem:[#allocation5 + $0x39]]
    %v1901 = vstv %s1900
    %v1902 = vmul.f32 %v1728, %v1901
    %v1903 = vmul.f32 %v1729, %v1901
    %v1904 = vadd.f32 %v1864, %v1902
    %v1905 = vadd.f32 %v1865, %v1903
    %s1906 = sld [smem:[#allocation5 + $0x3a]]
    %v1907 = vstv %s1906
    %v1908 = vmul.f32 %v1728, %v1907
    %v1909 = vmul.f32 %v1729, %v1907
    %v1910 = vadd.f32 %v1878, %v1908
    %v1911 = vadd.f32 %v1879, %v1909
    %s1912 = sld [smem:[#allocation5 + $0x3b]]
    %v1913 = vstv %s1912
    %v1914 = vmul.f32 %v1728, %v1913
    %v1915 = vmul.f32 %v1729, %v1913
    %v1916 = vadd.f32 %v1892, %v1914
    %v1917 = vadd.f32 %v1893, %v1915
    %s1918 = sld [smem:[#allocation5 + $0x58]]
    %v1919 = vstv %s1918
    %v1920 = vmul.f32 %v1728, %v1919
    %v1921 = vmul.f32 %v1729, %v1919
    %1924 = vrot.lane.b32.xlu0 %v1920, 127
    %v1925 = vpop.permute.xlu0 %1924
    %1926 = vrot.lane.b32.xlu0 %v1921, 127
    %v1927 = vpop.permute.xlu0 %1926
    %v1930 = vadd.f32 %v1898, %v1925
    %v1931 = vadd.f32 %v1899, %v1927
    %s1932 = sld [smem:[#allocation5 + $0x59]]
    %v1933 = vstv %s1932
    %v1934 = vmul.f32 %v1728, %v1933
    %v1935 = vmul.f32 %v1729, %v1933
    %1938 = vrot.lane.b32.xlu0 %v1934, 127
    %v1939 = vpop.permute.xlu0 %1938
    %1940 = vrot.lane.b32.xlu0 %v1935, 127
    %v1941 = vpop.permute.xlu0 %1940
    %v1944 = vadd.f32 %v1904, %v1939
    %v1945 = vadd.f32 %v1905, %v1941
    %s1946 = sld [smem:[#allocation5 + $0x5a]]
    %v1947 = vstv %s1946
    %v1948 = vmul.f32 %v1728, %v1947
    %v1949 = vmul.f32 %v1729, %v1947
    %1952 = vrot.lane.b32.xlu0 %v1948, 127
    %v1953 = vpop.permute.xlu0 %1952
    %1954 = vrot.lane.b32.xlu0 %v1949, 127
    %v1955 = vpop.permute.xlu0 %1954
    %v1958 = vadd.f32 %v1910, %v1953
    %v1959 = vadd.f32 %v1911, %v1955
    %s1960 = sld [smem:[#allocation5 + $0x5b]]
    %v1961 = vstv %s1960
    %v1962 = vmul.f32 %v1728, %v1961
    %v1963 = vmul.f32 %v1729, %v1961
    %1966 = vrot.lane.b32.xlu0 %v1962, 127
    %v1967 = vpop.permute.xlu0 %1966
    %1968 = vrot.lane.b32.xlu0 %v1963, 127
    %v1969 = vpop.permute.xlu0 %1968
    %v1972 = vadd.f32 %v1916, %v1967
    %v1973 = vadd.f32 %v1917, %v1969
    %s1974 = sld [smem:[#allocation5 + $0x3c]]
    %v1975 = vstv %s1974
    %v1976 = vmul.f32 %v1732, %v1975
    %v1977 = vmul.f32 %v1733, %v1975
    %v1978 = vadd.f32 %v1930, %v1976
    %v1979 = vadd.f32 %v1931, %v1977
    %s1980 = sld [smem:[#allocation5 + $0x3d]]
    %v1981 = vstv %s1980
    %v1982 = vmul.f32 %v1732, %v1981
    %v1983 = vmul.f32 %v1733, %v1981
    %v1984 = vadd.f32 %v1944, %v1982
    %v1985 = vadd.f32 %v1945, %v1983
    %s1986 = sld [smem:[#allocation5 + $0x3e]]
    %v1987 = vstv %s1986
    %v1988 = vmul.f32 %v1732, %v1987
    %v1989 = vmul.f32 %v1733, %v1987
    %v1990 = vadd.f32 %v1958, %v1988
    %v1991 = vadd.f32 %v1959, %v1989
    %s1992 = sld [smem:[#allocation5 + $0x3f]]
    %v1993 = vstv %s1992
    %v1994 = vmul.f32 %v1732, %v1993
    %v1995 = vmul.f32 %v1733, %v1993
    %v1996 = vadd.f32 %v1972, %v1994
    %v1997 = vadd.f32 %v1973, %v1995
    %s1998 = sld [smem:[#allocation5 + $0x5c]]
    %v1999 = vstv %s1998
    %v2000 = vmul.f32 %v1732, %v1999
    %v2001 = vmul.f32 %v1733, %v1999
    %2004 = vrot.lane.b32.xlu0 %v2000, 127
    %v2005 = vpop.permute.xlu0 %2004
    %2006 = vrot.lane.b32.xlu0 %v2001, 127
    %v2007 = vpop.permute.xlu0 %2006
    %v2010 = vadd.f32 %v1978, %v2005
    %v2011 = vadd.f32 %v1979, %v2007
    %s2012 = sld [smem:[#allocation5 + $0x5d]]
    %v2013 = vstv %s2012
    %v2014 = vmul.f32 %v1732, %v2013
    %v2015 = vmul.f32 %v1733, %v2013
    %2018 = vrot.lane.b32.xlu0 %v2014, 127
    %v2019 = vpop.permute.xlu0 %2018
    %2020 = vrot.lane.b32.xlu0 %v2015, 127
    %v2021 = vpop.permute.xlu0 %2020
    %v2024 = vadd.f32 %v1984, %v2019
    %v2025 = vadd.f32 %v1985, %v2021
    %s2026 = sld [smem:[#allocation5 + $0x5e]]
    %v2027 = vstv %s2026
    %v2028 = vmul.f32 %v1732, %v2027
    %v2029 = vmul.f32 %v1733, %v2027
    %2032 = vrot.lane.b32.xlu0 %v2028, 127
    %v2033 = vpop.permute.xlu0 %2032
    %2034 = vrot.lane.b32.xlu0 %v2029, 127
    %v2035 = vpop.permute.xlu0 %2034
    %v2038 = vadd.f32 %v1990, %v2033
    %v2039 = vadd.f32 %v1991, %v2035
    %s2040 = sld [smem:[#allocation5 + $0x5f]]
    %v2041 = vstv %s2040
    %v2042 = vmul.f32 %v1732, %v2041
    %v2043 = vmul.f32 %v1733, %v2041
    %2046 = vrot.lane.b32.xlu0 %v2042, 127
    %v2047 = vpop.permute.xlu0 %2046
    %2048 = vrot.lane.b32.xlu0 %v2043, 127
    %v2049 = vpop.permute.xlu0 %2048
    %v2052 = vadd.f32 %v1996, %v2047
    %v2053 = vadd.f32 %v1997, %v2049
    %s2054 = scalar_lea.vmem %s0, 192
    %v2055 = vld [vmem:[%s2054] sm:$0xff]
    %v2056 = vld [vmem:[%s2054 + $0x100] sm:$0xff]
    %s2057 = scalar_lea.vmem %s0, 208
    %v2058 = vld [vmem:[%s2057] sm:$0xff]
    %v2059 = vld [vmem:[%s2057 + $0x100] sm:$0xff]
    %s2060 = scalar_lea.vmem %s0, 224
    %v2061 = vld [vmem:[%s2060] sm:$0xff]
    %v2062 = vld [vmem:[%s2060 + $0x100] sm:$0xff]
    %s2063 = scalar_lea.vmem %s0, 240
    %v2064 = vld [vmem:[%s2063] sm:$0xff]
    %v2065 = vld [vmem:[%s2063 + $0x100] sm:$0xff]
    %v2066 = vmul.f32 %v2055, %v2055
    %v2067 = vmul.f32 %v2056, %v2056
    %v2068 = vmul.f32 %v2058, %v2058
    %v2069 = vmul.f32 %v2059, %v2059
    %v2070 = vadd.f32 %v2066, %v2068
    %v2071 = vadd.f32 %v2067, %v2069
    %v2072 = vmul.f32 %v2061, %v2061
    %v2073 = vmul.f32 %v2062, %v2062
    %v2074 = vadd.f32 %v2070, %v2072
    %v2075 = vadd.f32 %v2071, %v2073
    %v2076 = vmul.f32 %v2064, %v2064
    %v2077 = vmul.f32 %v2065, %v2065
    %v2078 = vadd.f32 %v2074, %v2076
    %v2079 = vadd.f32 %v2075, %v2077
    %v2080 = vmul.f32 %v2078, 0.25
    %v2081 = vmul.f32 %v2079, 0.25
    %v2082 = vadd.f32 %v2080, 1e-05
    %v2083 = vadd.f32 %v2081, 1e-05
    %v2084 = vrsqrt.pop %v2082
    %v2085 = vrsqrt.pop %v2083
    %v2086 = vmul.f32 %v2055, %v2084
    %v2087 = vmul.f32 %v2056, %v2085
    %v2088 = vmul.f32 %v2086, %v118
    %v2089 = vmul.f32 %v2087, %v118
    %v2090 = vmul.f32 %v2058, %v2084
    %v2091 = vmul.f32 %v2059, %v2085
    %v2092 = vmul.f32 %v2090, %v128
    %v2093 = vmul.f32 %v2091, %v128
    %v2094 = vmul.f32 %v2061, %v2084
    %v2095 = vmul.f32 %v2062, %v2085
    %v2096 = vmul.f32 %v2094, %v138
    %v2097 = vmul.f32 %v2095, %v138
    %v2098 = vmul.f32 %v2064, %v2084
    %v2099 = vmul.f32 %v2065, %v2085
    %v2100 = vmul.f32 %v2098, %v148
    %v2101 = vmul.f32 %v2099, %v148
    %s2102 = sld [smem:[#allocation5 + $0x40]]
    %v2103 = vstv %s2102
    %v2104 = vmul.f32 %v2088, %v2103
    %v2105 = vmul.f32 %v2089, %v2103
    %v2106 = vadd.f32 %v2010, %v2104
    %v2107 = vadd.f32 %v2011, %v2105
    %s2108 = sld [smem:[#allocation5 + $0x41]]
    %v2109 = vstv %s2108
    %v2110 = vmul.f32 %v2088, %v2109
    %v2111 = vmul.f32 %v2089, %v2109
    %v2112 = vadd.f32 %v2024, %v2110
    %v2113 = vadd.f32 %v2025, %v2111
    %s2114 = sld [smem:[#allocation5 + $0x42]]
    %v2115 = vstv %s2114
    %v2116 = vmul.f32 %v2088, %v2115
    %v2117 = vmul.f32 %v2089, %v2115
    %v2118 = vadd.f32 %v2038, %v2116
    %v2119 = vadd.f32 %v2039, %v2117
    %s2120 = sld [smem:[#allocation5 + $0x43]]
    %v2121 = vstv %s2120
    %v2122 = vmul.f32 %v2088, %v2121
    %v2123 = vmul.f32 %v2089, %v2121
    %v2124 = vadd.f32 %v2052, %v2122
    %v2125 = vadd.f32 %v2053, %v2123
    %s2126 = sld [smem:[#allocation5 + $0x44]]
    %v2127 = vstv %s2126
    %v2128 = vmul.f32 %v2092, %v2127
    %v2129 = vmul.f32 %v2093, %v2127
    %v2130 = vadd.f32 %v2106, %v2128
    %v2131 = vadd.f32 %v2107, %v2129
    %s2132 = sld [smem:[#allocation5 + $0x45]]
    %v2133 = vstv %s2132
    %v2134 = vmul.f32 %v2092, %v2133
    %v2135 = vmul.f32 %v2093, %v2133
    %v2136 = vadd.f32 %v2112, %v2134
    %v2137 = vadd.f32 %v2113, %v2135
    %s2138 = sld [smem:[#allocation5 + $0x46]]
    %v2139 = vstv %s2138
    %v2140 = vmul.f32 %v2092, %v2139
    %v2141 = vmul.f32 %v2093, %v2139
    %v2142 = vadd.f32 %v2118, %v2140
    %v2143 = vadd.f32 %v2119, %v2141
    %s2144 = sld [smem:[#allocation5 + $0x47]]
    %v2145 = vstv %s2144
    %v2146 = vmul.f32 %v2092, %v2145
    %v2147 = vmul.f32 %v2093, %v2145
    %v2148 = vadd.f32 %v2124, %v2146
    %v2149 = vadd.f32 %v2125, %v2147
    %s2150 = sld [smem:[#allocation5 + $0x48]]
    %v2151 = vstv %s2150
    %v2152 = vmul.f32 %v2096, %v2151
    %v2153 = vmul.f32 %v2097, %v2151
    %v2154 = vadd.f32 %v2130, %v2152
    %v2155 = vadd.f32 %v2131, %v2153
    %s2156 = sld [smem:[#allocation5 + $0x49]]
    %v2157 = vstv %s2156
    %v2158 = vmul.f32 %v2096, %v2157
    %v2159 = vmul.f32 %v2097, %v2157
    %v2160 = vadd.f32 %v2136, %v2158
    %v2161 = vadd.f32 %v2137, %v2159
    %s2162 = sld [smem:[#allocation5 + $0x4a]]
    %v2163 = vstv %s2162
    %v2164 = vmul.f32 %v2096, %v2163
    %v2165 = vmul.f32 %v2097, %v2163
    %v2166 = vadd.f32 %v2142, %v2164
    %v2167 = vadd.f32 %v2143, %v2165
    %s2168 = sld [smem:[#allocation5 + $0x4b]]
    %v2169 = vstv %s2168
    %v2170 = vmul.f32 %v2096, %v2169
    %v2171 = vmul.f32 %v2097, %v2169
    %v2172 = vadd.f32 %v2148, %v2170
    %v2173 = vadd.f32 %v2149, %v2171
    %s2174 = sld [smem:[#allocation5 + $0x4c]]
    %v2175 = vstv %s2174
    %v2176 = vmul.f32 %v2100, %v2175
    %v2177 = vmul.f32 %v2101, %v2175
    %v2178 = vadd.f32 %v2154, %v2176
    %v2179 = vadd.f32 %v2155, %v2177
    %s2180 = sld [smem:[#allocation5 + $0x4d]]
    %v2181 = vstv %s2180
    %v2182 = vmul.f32 %v2100, %v2181
    %v2183 = vmul.f32 %v2101, %v2181
    %v2184 = vadd.f32 %v2160, %v2182
    %v2185 = vadd.f32 %v2161, %v2183
    %s2186 = sld [smem:[#allocation5 + $0x4e]]
    %v2187 = vstv %s2186
    %v2188 = vmul.f32 %v2100, %v2187
    %v2189 = vmul.f32 %v2101, %v2187
    %v2190 = vadd.f32 %v2166, %v2188
    %v2191 = vadd.f32 %v2167, %v2189
    %s2192 = sld [smem:[#allocation5 + $0x4f]]
    %v2193 = vstv %s2192
    %v2194 = vmul.f32 %v2100, %v2193
    %v2195 = vmul.f32 %v2101, %v2193
    %v2196 = vadd.f32 %v2172, %v2194
    %v2197 = vadd.f32 %v2173, %v2195
    %s2198 = sld [smem:[#allocation7]]
    %v2199 = vstv %s2198
    %v2200 = vadd.f32 %v2178, %v2199
    %v2201 = vadd.f32 %v2179, %v2199
    %vm2202 = vcmask 64512
    %2203 = vst.msk [vmem:[#allocation8] sm:$0xff] %vm2202, %v2200
    %2204 = vst.msk [vmem:[#allocation8 + $0x20] sm:$0xff] %vm2202, %v2201
    %s2205 = sld [smem:[#allocation7 + $0x1]]
    %v2206 = vstv %s2205
    %v2207 = vadd.f32 %v2184, %v2206
    %v2208 = vadd.f32 %v2185, %v2206
    %s2209 = scalar_lea.vmem [#allocation8], 8
    %2210 = vst.msk [vmem:[%s2209] sm:$0xff] %vm2202, %v2207
    %2211 = vst.msk [vmem:[%s2209 + $0x20] sm:$0xff] %vm2202, %v2208
    %s2212 = sld [smem:[#allocation7 + $0x2]]
    %v2213 = vstv %s2212
    %v2214 = vadd.f32 %v2190, %v2213
    %v2215 = vadd.f32 %v2191, %v2213
    %s2216 = scalar_lea.vmem [#allocation8], 16
    %2217 = vst.msk [vmem:[%s2216] sm:$0xff] %vm2202, %v2214
    %2218 = vst.msk [vmem:[%s2216 + $0x20] sm:$0xff] %vm2202, %v2215
    %s2219 = sld [smem:[#allocation7 + $0x3]]
    %v2220 = vstv %s2219
    %v2221 = vadd.f32 %v2196, %v2220
    %v2222 = vadd.f32 %v2197, %v2220
    %s2223 = scalar_lea.vmem [#allocation8], 24
    %2224 = vst.msk [vmem:[%s2223] sm:$0xff] %vm2202, %v2221
    %2225 = vst.msk [vmem:[%s2223 + $0x20] sm:$0xff] %vm2202, %v2222
    // Predicated region
    $region30: #{downsample2d.1} parent=1 // pred_check
      _
    $region31: #{downsample2d.1} parent=1 // pred_check_branch
      %2227 = sbr.rel (0) target = $region33
    $region32: #{downsample2d.1} parent=1 // pred_region
      %s2229 = ssub.s32 1024, 1024
      %2230 = vsyncadd [#allocation3], %s2229
      %s2231 = sshll.u32 [#allocation8], 4
      %s2232 = int_to_ptr.vmem [resolvable:$true] %s2231
      %2237 = dma.vmem_to_hbm [thread:$0]  %s2232, 1024, %s4, [#allocation3], 128, 128, 8
    $region33: #{downsample2d.1} parent=1 // pred_fallthru
      _
    // Predicated region
    $region34: #{downsample2d.1} parent=1 // pred_check
      _
    $region35: #{downsample2d.1} parent=1 // pred_check_branch
      %2239 = sbr.rel (0) target = $region37
    $region36: #{downsample2d.1} parent=1 // pred_region
      %2240 = dma.done [#allocation3], 1024
    $region37: #{downsample2d.1} parent=1 // pred_fallthru
      _
    %2241 = vsyncpa [#allocation3], 1
    %2242 = vsyncpa [#allocation4], 1
    %2243 = vsyncpa [#allocation6], 1

</llo_original>
